<compile_context>
chip_gen: v6e
topology: v6e:2x2x1
jax: 0.10.0
libtpu: 0.0.40
codegen_flags: <defaults>
</compile_context>

<pallas_src>
import functools
import math

import jax
import jax.numpy as jnp
from jax.experimental import pallas as pl
from jax.experimental.pallas import tpu as pltpu


# ---------------------------------------------------------------------------
# Fused encoder kernel (one grid step == one batch element, full layer stack)
# ---------------------------------------------------------------------------

def _encoder_kernel(bias_ref, x_ref, wqkv_ref, bqkv_ref, wo_ref, bo_ref,
                    g_ref, b_ref, o_ref, *, n_layers, num_heads, eps):
    _, L, D = x_ref.shape
    d_k = D // num_heads
    cd = wqkv_ref.dtype                       # MXU input dtype (f32 or bf16)

    bias = bias_ref[...]                      # [L, L] additive f32 mask bias
    x = x_ref[0].astype(jnp.float32)          # [L, D] f32 activations

    for layer in range(n_layers):             # static unroll (n_layers small)
        # ---- fused Q/K/V projection: one (L,D)x(D,3D) MXU matmul ----------
        qkv = jnp.dot(x.astype(cd), wqkv_ref[layer],
                      preferred_element_type=jnp.float32)
        qkv = qkv + bqkv_ref[layer]            # [L, 3D] f32 (scale folded in Q)
        q = qkv[:, 0 * D:1 * D]
        k = qkv[:, 1 * D:2 * D]
        v = qkv[:, 2 * D:3 * D]

        wo_l = wo_ref[layer]                   # [D, D] (already transposed)

        # ---- per-head attention; heads merged via  ctx @ Wo == sum_h ctx_h @ Wo_h
        acc = jnp.zeros((L, D), jnp.float32)
        for h in range(num_heads):             # static unroll (num_heads small)
            sl = slice(h * d_k, (h + 1) * d_k)
            q_h = q[:, sl].astype(cd)          # [L, d_k]
            k_h = k[:, sl].astype(cd)
            v_h = v[:, sl].astype(cd)

            # scores: contract on d_k, no materialized transpose
            s = jax.lax.dot_general(q_h, k_h, (((1,), (1,)), ((), ())),
                                    preferred_element_type=jnp.float32)  # [L, L]
            s = s + bias

            # numerically stable softmax, exact divide (strict parity)
            m = jnp.max(s, axis=-1, keepdims=True)
            e = jnp.exp(s - m)
            p = e / jnp.sum(e, axis=-1, keepdims=True)

            ctx_h = jnp.dot(p.astype(cd), v_h,
                            preferred_element_type=jnp.float32)          # [L, d_k]
            acc = acc + jnp.dot(ctx_h.astype(cd), wo_l[sl, :],
                                preferred_element_type=jnp.float32)      # [L, D]

        x = acc + bo_ref[layer]                # [L, D] f32 layer output

    # ---- fused final LayerNorm (torch.std semantics: unbiased, eps on std) --
    mean = jnp.mean(x, axis=-1, keepdims=True)
    xc = x - mean
    var = jnp.sum(xc * xc, axis=-1, keepdims=True) * (1.0 / (D - 1))
    std = jnp.sqrt(var)
    y = g_ref[...] * (xc / (std + eps)) + b_ref[...]
    o_ref[0] = y.astype(o_ref.dtype)


# ---------------------------------------------------------------------------
# Wrappers
# ---------------------------------------------------------------------------

def prepare_encoder_params(layer_params, norm_params, *, num_heads,
                           compute_dtype=jnp.float32):
    """One-time parameter prep: transpose, fold 1/sqrt(d_k), stack per layer."""
    D = layer_params[0]["wq"].shape[0]
    d_k = D // num_heads
    scale = 1.0 / math.sqrt(d_k)

    wqkv, bqkv, wo, bo = [], [], [], []
    for p in layer_params:
        # PyTorch weights are [out, in]; use [in, out] and fuse Q|K|V columns.
        wqkv.append(jnp.concatenate(
            [p["wq"].T * scale, p["wk"].T, p["wv"].T], axis=1))       # [D, 3D]
        bqkv.append(jnp.concatenate(
            [p["bq"] * scale, p["bk"], p["bv"]], axis=0).reshape(1, 3 * D))
        wo.append(p["wo"].T)                                          # [D, D]
        bo.append(p["bo"].reshape(1, D))

    return {
        "wqkv": jnp.stack(wqkv).astype(compute_dtype),     # [n_layers, D, 3D]
        "bqkv": jnp.stack(bqkv).astype(jnp.float32),       # [n_layers, 1, 3D]
        "wo": jnp.stack(wo).astype(compute_dtype),         # [n_layers, D, D]
        "bo": jnp.stack(bo).astype(jnp.float32),           # [n_layers, 1, D]
        "gamma": norm_params["gamma"].reshape(1, D).astype(jnp.float32),
        "beta": norm_params["beta"].reshape(1, D).astype(jnp.float32),
    }


def encoder_forward(x, mask, params, *, num_heads, eps=1e-6):
    """Encoder.forward: x -> [self-attention layers] -> LayerNormalization."""
    B, L, D = x.shape
    n_layers = params["wqkv"].shape[0]

    # Additive f32 mask bias computed once (matches masked_fill(mask==0, -1e9)).
    bias = jnp.where(mask == 0, jnp.float32(-1e9), jnp.float32(0.0))

    out = pl.pallas_call(
        functools.partial(_encoder_kernel, n_layers=n_layers,
                          num_heads=num_heads, eps=eps),
        out_shape=jax.ShapeDtypeStruct((B, L, D), jnp.float32),
        grid_spec=pltpu.PrefetchScalarGridSpec(
            num_scalar_prefetch=0,
            grid=(B,),
            in_specs=[
                pl.BlockSpec((L, L), lambda b: (0, 0)),                   # mask bias
                pl.BlockSpec((1, L, D), lambda b: (b, 0, 0)),             # x
                pl.BlockSpec((n_layers, D, 3 * D), lambda b: (0, 0, 0)),  # wqkv
                pl.BlockSpec((n_layers, 1, 3 * D), lambda b: (0, 0, 0)),  # bqkv
                pl.BlockSpec((n_layers, D, D), lambda b: (0, 0, 0)),      # wo
                pl.BlockSpec((n_layers, 1, D), lambda b: (0, 0, 0)),      # bo
                pl.BlockSpec((1, D), lambda b: (0, 0)),                   # gamma
                pl.BlockSpec((1, D), lambda b: (0, 0)),                   # beta
            ],
            out_specs=pl.BlockSpec((1, L, D), lambda b: (b, 0, 0)),
        ),
        compiler_params=pltpu.CompilerParams(
            dimension_semantics=("parallel",)),   # >= 2 steps feeds both v7x TCs
    )(bias, x.astype(jnp.float32), params["wqkv"], params["bqkv"],
      params["wo"], params["bo"], params["gamma"], params["beta"])
    return out


# ---------------------------------------------------------------------------
# Pure-JAX reference mirroring the PyTorch forward
# ---------------------------------------------------------------------------

def _reference_encoder(x, mask, layer_params, norm_params, num_heads):
    def lin(t, w, b):
        return t @ w.T + b

    def mha(q, k, v, p):
        B, L, D = q.shape
        d_k = D // num_heads

        def split(t):
            return t.reshape(B, L, num_heads, d_k).transpose(0, 2, 1, 3)

        Q = split(lin(q, p["wq"], p["bq"]))
        K = split(lin(k, p["wk"], p["bk"]))
        V = split(lin(v, p["wv"], p["bv"]))
        s = jnp.einsum("bhqd,bhkd->bhqk", Q, K) / math.sqrt(d_k)
        s = jnp.where(mask[None, None] == 0, -1e9, s)
        a = jax.nn.softmax(s, axis=-1)
        c = jnp.einsum("bhqk,bhkd->bhqd", a, V)
        c = c.transpose(0, 2, 1, 3).reshape(B, L, D)
        return lin(c, p["wo"], p["bo"])

    for p in layer_params:
        x = mha(x, x, x, p)
    mean = x.mean(-1, keepdims=True)
    std = jnp.std(x, axis=-1, keepdims=True, ddof=1)     # torch.std (unbiased)
    return norm_params["gamma"] * (x - mean) / (std + 1e-6) + norm_params["beta"]


if __name__ == "__main__":
    B, L, d_model, h, n_layers = 2, 8, 32, 4, 2
    key = jax.random.PRNGKey(0)
    bound = 1.0 / math.sqrt(d_model)

    def unif(k, shape):
        return jax.random.uniform(k, shape, jnp.float32, -bound, bound)

    keys = jax.random.split(key, 8 * n_layers + 3)
    layer_params = []
    for i in range(n_layers):
        ks = keys[8 * i: 8 * (i + 1)]
        layer_params.append({
            "wq": unif(ks[0], (d_model, d_model)), "bq": unif(ks[1], (d_model,)),
            "wk": unif(ks[2], (d_model, d_model)), "bk": unif(ks[3], (d_model,)),
            "wv": unif(ks[4], (d_model, d_model)), "bv": unif(ks[5], (d_model,)),
            "wo": unif(ks[6], (d_model, d_model)), "bo": unif(ks[7], (d_model,)),
        })
    norm_params = {
        "gamma": 1.0 + 0.1 * jax.random.normal(keys[-3], (d_model,), jnp.float32),
        "beta": 0.1 * jax.random.normal(keys[-2], (d_model,), jnp.float32),
    }

    x = jax.random.normal(keys[-1], (B, L, d_model), jnp.float32)
    # causal mask, [L, L] int32; 0 => masked (matches masked_fill(mask == 0, -1e9))
    mask = jnp.tril(jnp.ones((L, L), jnp.int32))

    ref = _reference_encoder(x, mask, layer_params, norm_params, h)

    fwd = jax.jit(functools.partial(encoder_forward, num_heads=h))

    # f32 path (default): strict PyTorch parity (exact divides).
    params_f32 = prepare_encoder_params(layer_params, norm_params, num_heads=h)
    out = jax.block_until_ready(fwd(x, mask, params_f32))
    assert out.shape == (B, L, d_model)
    assert jnp.allclose(out, ref, atol=5e-3, rtol=5e-3), "f32 kernel mismatch vs reference"

    # bf16 MXU-input path (v6e/v7x recommendation; f32 accumulation + softmax).
    params_bf16 = prepare_encoder_params(layer_params, norm_params, num_heads=h,
                                         compute_dtype=jnp.bfloat16)
    out_bf16 = jax.block_until_ready(fwd(x, mask, params_bf16))
    assert jnp.allclose(out_bf16, ref, atol=1e-1, rtol=1e-1), "bf16 kernel mismatch vs reference"

    print("KERNEL_OK")
</pallas_src>

<mosaic_0001>
module attributes {stable_mosaic.version = 11 : i64} {
  func.func @_encoder_kernel(%arg0: i32, %arg1: memref<8x8xf32, #tpu.memory_space<vmem>>, %arg2: memref<1x8x32xf32, #tpu.memory_space<vmem>>, %arg3: memref<2x32x96xf32, #tpu.memory_space<vmem>>, %arg4: memref<2x1x96xf32, #tpu.memory_space<vmem>>, %arg5: memref<2x32x32xf32, #tpu.memory_space<vmem>>, %arg6: memref<2x1x32xf32, #tpu.memory_space<vmem>>, %arg7: memref<1x32xf32, #tpu.memory_space<vmem>>, %arg8: memref<1x32xf32, #tpu.memory_space<vmem>>, %arg9: memref<1x8x32xf32, #tpu.memory_space<vmem>>) attributes {dimension_semantics = [#tpu.dimension_semantics<parallel>], iteration_bounds = array<i64: 2>, scalar_prefetch = 0 : i64, scratch_operands = 0 : i64, tpu.core_type = #tpu.core_type<tc>, window_params = [{pipeline_mode = #tpu.pipeline_mode<synchronous>, transform_indices = @transform_0, window_bounds = array<i64: 8, 8>}, {transform_indices = @transform_1, window_bounds = array<i64: 1, 8, 32>}, {pipeline_mode = #tpu.pipeline_mode<synchronous>, transform_indices = @transform_2, window_bounds = array<i64: 2, 32, 96>}, {pipeline_mode = #tpu.pipeline_mode<synchronous>, transform_indices = @transform_3, window_bounds = array<i64: 2, 1, 96>}, {pipeline_mode = #tpu.pipeline_mode<synchronous>, transform_indices = @transform_4, window_bounds = array<i64: 2, 32, 32>}, {pipeline_mode = #tpu.pipeline_mode<synchronous>, transform_indices = @transform_5, window_bounds = array<i64: 2, 1, 32>}, {pipeline_mode = #tpu.pipeline_mode<synchronous>, transform_indices = @transform_6, window_bounds = array<i64: 1, 32>}, {pipeline_mode = #tpu.pipeline_mode<synchronous>, transform_indices = @transform_7, window_bounds = array<i64: 1, 32>}, {transform_indices = @transform_8, window_bounds = array<i64: 1, 8, 32>}]} {
    %c0 = arith.constant 0 : index
    %c0_0 = arith.constant 0 : index
    %0 = vector.load %arg1[%c0, %c0_0] : memref<8x8xf32, #tpu.memory_space<vmem>>, vector<8x8xf32>
    %c0_1 = arith.constant 0 : index
    %c0_2 = arith.constant 0 : index
    %c0_3 = arith.constant 0 : index
    %1 = vector.load %arg2[%c0_1, %c0_2, %c0_3] : memref<1x8x32xf32, #tpu.memory_space<vmem>>, vector<1x8x32xf32>
    %2 = vector.shape_cast %1 : vector<1x8x32xf32> to vector<8x32xf32>
    %c0_4 = arith.constant 0 : index
    %c0_5 = arith.constant 0 : index
    %c0_6 = arith.constant 0 : index
    %3 = vector.load %arg3[%c0_4, %c0_5, %c0_6] : memref<2x32x96xf32, #tpu.memory_space<vmem>>, vector<1x32x96xf32>
    %4 = vector.shape_cast %3 : vector<1x32x96xf32> to vector<32x96xf32>
    %cst = arith.constant dense<0.000000e+00> : vector<8x96xf32>
    %5 = tpu.matmul %2, %4, %cst {dimension_numbers = #tpu.dot_dimension_numbers<[1], [0], [0], [1], [0, 0, 1, 1], [], []>} : vector<8x32xf32>, vector<32x96xf32>, vector<8x96xf32> -> vector<8x96xf32>
    %c0_7 = arith.constant 0 : index
    %c0_8 = arith.constant 0 : index
    %c0_9 = arith.constant 0 : index
    %6 = vector.load %arg4[%c0_7, %c0_8, %c0_9] : memref<2x1x96xf32, #tpu.memory_space<vmem>>, vector<1x1x96xf32>
    %7 = vector.shape_cast %6 : vector<1x1x96xf32> to vector<1x96xf32>
    %8 = vector.broadcast %7 : vector<1x96xf32> to vector<8x96xf32>
    %9 = arith.addf %5, %8 : vector<8x96xf32>
    %10 = vector.extract_strided_slice %9 {offsets = [0, 0], sizes = [8, 32], strides = [1, 1]} : vector<8x96xf32> to vector<8x32xf32>
    %11 = vector.extract_strided_slice %9 {offsets = [0, 32], sizes = [8, 32], strides = [1, 1]} : vector<8x96xf32> to vector<8x32xf32>
    %12 = vector.extract_strided_slice %9 {offsets = [0, 64], sizes = [8, 32], strides = [1, 1]} : vector<8x96xf32> to vector<8x32xf32>
    %c0_10 = arith.constant 0 : index
    %c0_11 = arith.constant 0 : index
    %c0_12 = arith.constant 0 : index
    %13 = vector.load %arg5[%c0_10, %c0_11, %c0_12] : memref<2x32x32xf32, #tpu.memory_space<vmem>>, vector<1x32x32xf32>
    %14 = vector.shape_cast %13 : vector<1x32x32xf32> to vector<32x32xf32>
    %cst_13 = arith.constant 0.000000e+00 : f32
    %15 = vector.broadcast %cst_13 : f32 to vector<8x32xf32>
    %16 = vector.extract_strided_slice %10 {offsets = [0, 0], sizes = [8, 8], strides = [1, 1]} : vector<8x32xf32> to vector<8x8xf32>
    %17 = vector.extract_strided_slice %11 {offsets = [0, 0], sizes = [8, 8], strides = [1, 1]} : vector<8x32xf32> to vector<8x8xf32>
    %18 = vector.extract_strided_slice %12 {offsets = [0, 0], sizes = [8, 8], strides = [1, 1]} : vector<8x32xf32> to vector<8x8xf32>
    %cst_14 = arith.constant dense<0.000000e+00> : vector<8x8xf32>
    %19 = tpu.matmul %16, %17, %cst_14 {dimension_numbers = #tpu.dot_dimension_numbers<[1], [1], [0], [0], [0, 0, 1, 0], [], []>} : vector<8x8xf32>, vector<8x8xf32>, vector<8x8xf32> -> vector<8x8xf32>
    %20 = arith.addf %19, %0 : vector<8x8xf32>
    %cst_15 = arith.constant dense<0xFF800000> : vector<8xf32>
    %21 = vector.multi_reduction <maximumf>, %20, %cst_15 [1] : vector<8x8xf32> to vector<8xf32>
    %22 = vector.shape_cast %21 : vector<8xf32> to vector<8x1xf32>
    %23 = vector.broadcast %22 : vector<8x1xf32> to vector<8x8xf32>
    %24 = arith.subf %20, %23 : vector<8x8xf32>
    %25 = math.exp %24 : vector<8x8xf32>
    %cst_16 = arith.constant dense<0.000000e+00> : vector<8xf32>
    %26 = vector.multi_reduction <add>, %25, %cst_16 [1] : vector<8x8xf32> to vector<8xf32>
    %27 = vector.shape_cast %26 : vector<8xf32> to vector<8x1xf32>
    %28 = vector.broadcast %27 : vector<8x1xf32> to vector<8x8xf32>
    %29 = arith.divf %25, %28 : vector<8x8xf32>
    %cst_17 = arith.constant dense<0.000000e+00> : vector<8x8xf32>
    %30 = tpu.matmul %29, %18, %cst_17 {dimension_numbers = #tpu.dot_dimension_numbers<[1], [0], [0], [1], [0, 0, 1, 1], [], []>} : vector<8x8xf32>, vector<8x8xf32>, vector<8x8xf32> -> vector<8x8xf32>
    %31 = vector.extract_strided_slice %14 {offsets = [0, 0], sizes = [8, 32], strides = [1, 1]} : vector<32x32xf32> to vector<8x32xf32>
    %cst_18 = arith.constant dense<0.000000e+00> : vector<8x32xf32>
    %32 = tpu.matmul %30, %31, %cst_18 {dimension_numbers = #tpu.dot_dimension_numbers<[1], [0], [0], [1], [0, 0, 1, 1], [], []>} : vector<8x8xf32>, vector<8x32xf32>, vector<8x32xf32> -> vector<8x32xf32>
    %33 = arith.addf %15, %32 : vector<8x32xf32>
    %34 = vector.extract_strided_slice %10 {offsets = [0, 8], sizes = [8, 8], strides = [1, 1]} : vector<8x32xf32> to vector<8x8xf32>
    %35 = vector.extract_strided_slice %11 {offsets = [0, 8], sizes = [8, 8], strides = [1, 1]} : vector<8x32xf32> to vector<8x8xf32>
    %36 = vector.extract_strided_slice %12 {offsets = [0, 8], sizes = [8, 8], strides = [1, 1]} : vector<8x32xf32> to vector<8x8xf32>
    %cst_19 = arith.constant dense<0.000000e+00> : vector<8x8xf32>
    %37 = tpu.matmul %34, %35, %cst_19 {dimension_numbers = #tpu.dot_dimension_numbers<[1], [1], [0], [0], [0, 0, 1, 0], [], []>} : vector<8x8xf32>, vector<8x8xf32>, vector<8x8xf32> -> vector<8x8xf32>
    %38 = arith.addf %37, %0 : vector<8x8xf32>
    %cst_20 = arith.constant dense<0xFF800000> : vector<8xf32>
    %39 = vector.multi_reduction <maximumf>, %38, %cst_20 [1] : vector<8x8xf32> to vector<8xf32>
    %40 = vector.shape_cast %39 : vector<8xf32> to vector<8x1xf32>
    %41 = vector.broadcast %40 : vector<8x1xf32> to vector<8x8xf32>
    %42 = arith.subf %38, %41 : vector<8x8xf32>
    %43 = math.exp %42 : vector<8x8xf32>
    %cst_21 = arith.constant dense<0.000000e+00> : vector<8xf32>
    %44 = vector.multi_reduction <add>, %43, %cst_21 [1] : vector<8x8xf32> to vector<8xf32>
    %45 = vector.shape_cast %44 : vector<8xf32> to vector<8x1xf32>
    %46 = vector.broadcast %45 : vector<8x1xf32> to vector<8x8xf32>
    %47 = arith.divf %43, %46 : vector<8x8xf32>
    %cst_22 = arith.constant dense<0.000000e+00> : vector<8x8xf32>
    %48 = tpu.matmul %47, %36, %cst_22 {dimension_numbers = #tpu.dot_dimension_numbers<[1], [0], [0], [1], [0, 0, 1, 1], [], []>} : vector<8x8xf32>, vector<8x8xf32>, vector<8x8xf32> -> vector<8x8xf32>
    %49 = vector.extract_strided_slice %14 {offsets = [8, 0], sizes = [8, 32], strides = [1, 1]} : vector<32x32xf32> to vector<8x32xf32>
    %cst_23 = arith.constant dense<0.000000e+00> : vector<8x32xf32>
    %50 = tpu.matmul %48, %49, %cst_23 {dimension_numbers = #tpu.dot_dimension_numbers<[1], [0], [0], [1], [0, 0, 1, 1], [], []>} : vector<8x8xf32>, vector<8x32xf32>, vector<8x32xf32> -> vector<8x32xf32>
    %51 = arith.addf %33, %50 : vector<8x32xf32>
    %52 = vector.extract_strided_slice %10 {offsets = [0, 16], sizes = [8, 8], strides = [1, 1]} : vector<8x32xf32> to vector<8x8xf32>
    %53 = vector.extract_strided_slice %11 {offsets = [0, 16], sizes = [8, 8], strides = [1, 1]} : vector<8x32xf32> to vector<8x8xf32>
    %54 = vector.extract_strided_slice %12 {offsets = [0, 16], sizes = [8, 8], strides = [1, 1]} : vector<8x32xf32> to vector<8x8xf32>
    %cst_24 = arith.constant dense<0.000000e+00> : vector<8x8xf32>
    %55 = tpu.matmul %52, %53, %cst_24 {dimension_numbers = #tpu.dot_dimension_numbers<[1], [1], [0], [0], [0, 0, 1, 0], [], []>} : vector<8x8xf32>, vector<8x8xf32>, vector<8x8xf32> -> vector<8x8xf32>
    %56 = arith.addf %55, %0 : vector<8x8xf32>
    %cst_25 = arith.constant dense<0xFF800000> : vector<8xf32>
    %57 = vector.multi_reduction <maximumf>, %56, %cst_25 [1] : vector<8x8xf32> to vector<8xf32>
    %58 = vector.shape_cast %57 : vector<8xf32> to vector<8x1xf32>
    %59 = vector.broadcast %58 : vector<8x1xf32> to vector<8x8xf32>
    %60 = arith.subf %56, %59 : vector<8x8xf32>
    %61 = math.exp %60 : vector<8x8xf32>
    %cst_26 = arith.constant dense<0.000000e+00> : vector<8xf32>
    %62 = vector.multi_reduction <add>, %61, %cst_26 [1] : vector<8x8xf32> to vector<8xf32>
    %63 = vector.shape_cast %62 : vector<8xf32> to vector<8x1xf32>
    %64 = vector.broadcast %63 : vector<8x1xf32> to vector<8x8xf32>
    %65 = arith.divf %61, %64 : vector<8x8xf32>
    %cst_27 = arith.constant dense<0.000000e+00> : vector<8x8xf32>
    %66 = tpu.matmul %65, %54, %cst_27 {dimension_numbers = #tpu.dot_dimension_numbers<[1], [0], [0], [1], [0, 0, 1, 1], [], []>} : vector<8x8xf32>, vector<8x8xf32>, vector<8x8xf32> -> vector<8x8xf32>
    %67 = vector.extract_strided_slice %14 {offsets = [16, 0], sizes = [8, 32], strides = [1, 1]} : vector<32x32xf32> to vector<8x32xf32>
    %cst_28 = arith.constant dense<0.000000e+00> : vector<8x32xf32>
    %68 = tpu.matmul %66, %67, %cst_28 {dimension_numbers = #tpu.dot_dimension_numbers<[1], [0], [0], [1], [0, 0, 1, 1], [], []>} : vector<8x8xf32>, vector<8x32xf32>, vector<8x32xf32> -> vector<8x32xf32>
    %69 = arith.addf %51, %68 : vector<8x32xf32>
    %70 = vector.extract_strided_slice %10 {offsets = [0, 24], sizes = [8, 8], strides = [1, 1]} : vector<8x32xf32> to vector<8x8xf32>
    %71 = vector.extract_strided_slice %11 {offsets = [0, 24], sizes = [8, 8], strides = [1, 1]} : vector<8x32xf32> to vector<8x8xf32>
    %72 = vector.extract_strided_slice %12 {offsets = [0, 24], sizes = [8, 8], strides = [1, 1]} : vector<8x32xf32> to vector<8x8xf32>
    %cst_29 = arith.constant dense<0.000000e+00> : vector<8x8xf32>
    %73 = tpu.matmul %70, %71, %cst_29 {dimension_numbers = #tpu.dot_dimension_numbers<[1], [1], [0], [0], [0, 0, 1, 0], [], []>} : vector<8x8xf32>, vector<8x8xf32>, vector<8x8xf32> -> vector<8x8xf32>
    %74 = arith.addf %73, %0 : vector<8x8xf32>
    %cst_30 = arith.constant dense<0xFF800000> : vector<8xf32>
    %75 = vector.multi_reduction <maximumf>, %74, %cst_30 [1] : vector<8x8xf32> to vector<8xf32>
    %76 = vector.shape_cast %75 : vector<8xf32> to vector<8x1xf32>
    %77 = vector.broadcast %76 : vector<8x1xf32> to vector<8x8xf32>
    %78 = arith.subf %74, %77 : vector<8x8xf32>
    %79 = math.exp %78 : vector<8x8xf32>
    %cst_31 = arith.constant dense<0.000000e+00> : vector<8xf32>
    %80 = vector.multi_reduction <add>, %79, %cst_31 [1] : vector<8x8xf32> to vector<8xf32>
    %81 = vector.shape_cast %80 : vector<8xf32> to vector<8x1xf32>
    %82 = vector.broadcast %81 : vector<8x1xf32> to vector<8x8xf32>
    %83 = arith.divf %79, %82 : vector<8x8xf32>
    %cst_32 = arith.constant dense<0.000000e+00> : vector<8x8xf32>
    %84 = tpu.matmul %83, %72, %cst_32 {dimension_numbers = #tpu.dot_dimension_numbers<[1], [0], [0], [1], [0, 0, 1, 1], [], []>} : vector<8x8xf32>, vector<8x8xf32>, vector<8x8xf32> -> vector<8x8xf32>
    %85 = vector.extract_strided_slice %14 {offsets = [24, 0], sizes = [8, 32], strides = [1, 1]} : vector<32x32xf32> to vector<8x32xf32>
    %cst_33 = arith.constant dense<0.000000e+00> : vector<8x32xf32>
    %86 = tpu.matmul %84, %85, %cst_33 {dimension_numbers = #tpu.dot_dimension_numbers<[1], [0], [0], [1], [0, 0, 1, 1], [], []>} : vector<8x8xf32>, vector<8x32xf32>, vector<8x32xf32> -> vector<8x32xf32>
    %87 = arith.addf %69, %86 : vector<8x32xf32>
    %c0_34 = arith.constant 0 : index
    %c0_35 = arith.constant 0 : index
    %c0_36 = arith.constant 0 : index
    %88 = vector.load %arg6[%c0_34, %c0_35, %c0_36] : memref<2x1x32xf32, #tpu.memory_space<vmem>>, vector<1x1x32xf32>
    %89 = vector.shape_cast %88 : vector<1x1x32xf32> to vector<1x32xf32>
    %90 = vector.broadcast %89 : vector<1x32xf32> to vector<8x32xf32>
    %91 = arith.addf %87, %90 : vector<8x32xf32>
    %c1 = arith.constant 1 : index
    %c0_37 = arith.constant 0 : index
    %c0_38 = arith.constant 0 : index
    %92 = vector.load %arg3[%c1, %c0_37, %c0_38] : memref<2x32x96xf32, #tpu.memory_space<vmem>>, vector<1x32x96xf32>
    %93 = vector.shape_cast %92 : vector<1x32x96xf32> to vector<32x96xf32>
    %cst_39 = arith.constant dense<0.000000e+00> : vector<8x96xf32>
    %94 = tpu.matmul %91, %93, %cst_39 {dimension_numbers = #tpu.dot_dimension_numbers<[1], [0], [0], [1], [0, 0, 1, 1], [], []>} : vector<8x32xf32>, vector<32x96xf32>, vector<8x96xf32> -> vector<8x96xf32>
    %c1_40 = arith.constant 1 : index
    %c0_41 = arith.constant 0 : index
    %c0_42 = arith.constant 0 : index
    %95 = vector.load %arg4[%c1_40, %c0_41, %c0_42] : memref<2x1x96xf32, #tpu.memory_space<vmem>>, vector<1x1x96xf32>
    %96 = vector.shape_cast %95 : vector<1x1x96xf32> to vector<1x96xf32>
    %97 = vector.broadcast %96 : vector<1x96xf32> to vector<8x96xf32>
    %98 = arith.addf %94, %97 : vector<8x96xf32>
    %99 = vector.extract_strided_slice %98 {offsets = [0, 0], sizes = [8, 32], strides = [1, 1]} : vector<8x96xf32> to vector<8x32xf32>
    %100 = vector.extract_strided_slice %98 {offsets = [0, 32], sizes = [8, 32], strides = [1, 1]} : vector<8x96xf32> to vector<8x32xf32>
    %101 = vector.extract_strided_slice %98 {offsets = [0, 64], sizes = [8, 32], strides = [1, 1]} : vector<8x96xf32> to vector<8x32xf32>
    %c1_43 = arith.constant 1 : index
    %c0_44 = arith.constant 0 : index
    %c0_45 = arith.constant 0 : index
    %102 = vector.load %arg5[%c1_43, %c0_44, %c0_45] : memref<2x32x32xf32, #tpu.memory_space<vmem>>, vector<1x32x32xf32>
    %103 = vector.shape_cast %102 : vector<1x32x32xf32> to vector<32x32xf32>
    %cst_46 = arith.constant 0.000000e+00 : f32
    %104 = vector.broadcast %cst_46 : f32 to vector<8x32xf32>
    %105 = vector.extract_strided_slice %99 {offsets = [0, 0], sizes = [8, 8], strides = [1, 1]} : vector<8x32xf32> to vector<8x8xf32>
    %106 = vector.extract_strided_slice %100 {offsets = [0, 0], sizes = [8, 8], strides = [1, 1]} : vector<8x32xf32> to vector<8x8xf32>
    %107 = vector.extract_strided_slice %101 {offsets = [0, 0], sizes = [8, 8], strides = [1, 1]} : vector<8x32xf32> to vector<8x8xf32>
    %cst_47 = arith.constant dense<0.000000e+00> : vector<8x8xf32>
    %108 = tpu.matmul %105, %106, %cst_47 {dimension_numbers = #tpu.dot_dimension_numbers<[1], [1], [0], [0], [0, 0, 1, 0], [], []>} : vector<8x8xf32>, vector<8x8xf32>, vector<8x8xf32> -> vector<8x8xf32>
    %109 = arith.addf %108, %0 : vector<8x8xf32>
    %cst_48 = arith.constant dense<0xFF800000> : vector<8xf32>
    %110 = vector.multi_reduction <maximumf>, %109, %cst_48 [1] : vector<8x8xf32> to vector<8xf32>
    %111 = vector.shape_cast %110 : vector<8xf32> to vector<8x1xf32>
    %112 = vector.broadcast %111 : vector<8x1xf32> to vector<8x8xf32>
    %113 = arith.subf %109, %112 : vector<8x8xf32>
    %114 = math.exp %113 : vector<8x8xf32>
    %cst_49 = arith.constant dense<0.000000e+00> : vector<8xf32>
    %115 = vector.multi_reduction <add>, %114, %cst_49 [1] : vector<8x8xf32> to vector<8xf32>
    %116 = vector.shape_cast %115 : vector<8xf32> to vector<8x1xf32>
    %117 = vector.broadcast %116 : vector<8x1xf32> to vector<8x8xf32>
    %118 = arith.divf %114, %117 : vector<8x8xf32>
    %cst_50 = arith.constant dense<0.000000e+00> : vector<8x8xf32>
    %119 = tpu.matmul %118, %107, %cst_50 {dimension_numbers = #tpu.dot_dimension_numbers<[1], [0], [0], [1], [0, 0, 1, 1], [], []>} : vector<8x8xf32>, vector<8x8xf32>, vector<8x8xf32> -> vector<8x8xf32>
    %120 = vector.extract_strided_slice %103 {offsets = [0, 0], sizes = [8, 32], strides = [1, 1]} : vector<32x32xf32> to vector<8x32xf32>
    %cst_51 = arith.constant dense<0.000000e+00> : vector<8x32xf32>
    %121 = tpu.matmul %119, %120, %cst_51 {dimension_numbers = #tpu.dot_dimension_numbers<[1], [0], [0], [1], [0, 0, 1, 1], [], []>} : vector<8x8xf32>, vector<8x32xf32>, vector<8x32xf32> -> vector<8x32xf32>
    %122 = arith.addf %104, %121 : vector<8x32xf32>
    %123 = vector.extract_strided_slice %99 {offsets = [0, 8], sizes = [8, 8], strides = [1, 1]} : vector<8x32xf32> to vector<8x8xf32>
    %124 = vector.extract_strided_slice %100 {offsets = [0, 8], sizes = [8, 8], strides = [1, 1]} : vector<8x32xf32> to vector<8x8xf32>
    %125 = vector.extract_strided_slice %101 {offsets = [0, 8], sizes = [8, 8], strides = [1, 1]} : vector<8x32xf32> to vector<8x8xf32>
    %cst_52 = arith.constant dense<0.000000e+00> : vector<8x8xf32>
    %126 = tpu.matmul %123, %124, %cst_52 {dimension_numbers = #tpu.dot_dimension_numbers<[1], [1], [0], [0], [0, 0, 1, 0], [], []>} : vector<8x8xf32>, vector<8x8xf32>, vector<8x8xf32> -> vector<8x8xf32>
    %127 = arith.addf %126, %0 : vector<8x8xf32>
    %cst_53 = arith.constant dense<0xFF800000> : vector<8xf32>
    %128 = vector.multi_reduction <maximumf>, %127, %cst_53 [1] : vector<8x8xf32> to vector<8xf32>
    %129 = vector.shape_cast %128 : vector<8xf32> to vector<8x1xf32>
    %130 = vector.broadcast %129 : vector<8x1xf32> to vector<8x8xf32>
    %131 = arith.subf %127, %130 : vector<8x8xf32>
    %132 = math.exp %131 : vector<8x8xf32>
    %cst_54 = arith.constant dense<0.000000e+00> : vector<8xf32>
    %133 = vector.multi_reduction <add>, %132, %cst_54 [1] : vector<8x8xf32> to vector<8xf32>
    %134 = vector.shape_cast %133 : vector<8xf32> to vector<8x1xf32>
    %135 = vector.broadcast %134 : vector<8x1xf32> to vector<8x8xf32>
    %136 = arith.divf %132, %135 : vector<8x8xf32>
    %cst_55 = arith.constant dense<0.000000e+00> : vector<8x8xf32>
    %137 = tpu.matmul %136, %125, %cst_55 {dimension_numbers = #tpu.dot_dimension_numbers<[1], [0], [0], [1], [0, 0, 1, 1], [], []>} : vector<8x8xf32>, vector<8x8xf32>, vector<8x8xf32> -> vector<8x8xf32>
    %138 = vector.extract_strided_slice %103 {offsets = [8, 0], sizes = [8, 32], strides = [1, 1]} : vector<32x32xf32> to vector<8x32xf32>
    %cst_56 = arith.constant dense<0.000000e+00> : vector<8x32xf32>
    %139 = tpu.matmul %137, %138, %cst_56 {dimension_numbers = #tpu.dot_dimension_numbers<[1], [0], [0], [1], [0, 0, 1, 1], [], []>} : vector<8x8xf32>, vector<8x32xf32>, vector<8x32xf32> -> vector<8x32xf32>
    %140 = arith.addf %122, %139 : vector<8x32xf32>
    %141 = vector.extract_strided_slice %99 {offsets = [0, 16], sizes = [8, 8], strides = [1, 1]} : vector<8x32xf32> to vector<8x8xf32>
    %142 = vector.extract_strided_slice %100 {offsets = [0, 16], sizes = [8, 8], strides = [1, 1]} : vector<8x32xf32> to vector<8x8xf32>
    %143 = vector.extract_strided_slice %101 {offsets = [0, 16], sizes = [8, 8], strides = [1, 1]} : vector<8x32xf32> to vector<8x8xf32>
    %cst_57 = arith.constant dense<0.000000e+00> : vector<8x8xf32>
    %144 = tpu.matmul %141, %142, %cst_57 {dimension_numbers = #tpu.dot_dimension_numbers<[1], [1], [0], [0], [0, 0, 1, 0], [], []>} : vector<8x8xf32>, vector<8x8xf32>, vector<8x8xf32> -> vector<8x8xf32>
    %145 = arith.addf %144, %0 : vector<8x8xf32>
    %cst_58 = arith.constant dense<0xFF800000> : vector<8xf32>
    %146 = vector.multi_reduction <maximumf>, %145, %cst_58 [1] : vector<8x8xf32> to vector<8xf32>
    %147 = vector.shape_cast %146 : vector<8xf32> to vector<8x1xf32>
    %148 = vector.broadcast %147 : vector<8x1xf32> to vector<8x8xf32>
    %149 = arith.subf %145, %148 : vector<8x8xf32>
    %150 = math.exp %149 : vector<8x8xf32>
    %cst_59 = arith.constant dense<0.000000e+00> : vector<8xf32>
    %151 = vector.multi_reduction <add>, %150, %cst_59 [1] : vector<8x8xf32> to vector<8xf32>
    %152 = vector.shape_cast %151 : vector<8xf32> to vector<8x1xf32>
    %153 = vector.broadcast %152 : vector<8x1xf32> to vector<8x8xf32>
    %154 = arith.divf %150, %153 : vector<8x8xf32>
    %cst_60 = arith.constant dense<0.000000e+00> : vector<8x8xf32>
    %155 = tpu.matmul %154, %143, %cst_60 {dimension_numbers = #tpu.dot_dimension_numbers<[1], [0], [0], [1], [0, 0, 1, 1], [], []>} : vector<8x8xf32>, vector<8x8xf32>, vector<8x8xf32> -> vector<8x8xf32>
    %156 = vector.extract_strided_slice %103 {offsets = [16, 0], sizes = [8, 32], strides = [1, 1]} : vector<32x32xf32> to vector<8x32xf32>
    %cst_61 = arith.constant dense<0.000000e+00> : vector<8x32xf32>
    %157 = tpu.matmul %155, %156, %cst_61 {dimension_numbers = #tpu.dot_dimension_numbers<[1], [0], [0], [1], [0, 0, 1, 1], [], []>} : vector<8x8xf32>, vector<8x32xf32>, vector<8x32xf32> -> vector<8x32xf32>
    %158 = arith.addf %140, %157 : vector<8x32xf32>
    %159 = vector.extract_strided_slice %99 {offsets = [0, 24], sizes = [8, 8], strides = [1, 1]} : vector<8x32xf32> to vector<8x8xf32>
    %160 = vector.extract_strided_slice %100 {offsets = [0, 24], sizes = [8, 8], strides = [1, 1]} : vector<8x32xf32> to vector<8x8xf32>
    %161 = vector.extract_strided_slice %101 {offsets = [0, 24], sizes = [8, 8], strides = [1, 1]} : vector<8x32xf32> to vector<8x8xf32>
    %cst_62 = arith.constant dense<0.000000e+00> : vector<8x8xf32>
    %162 = tpu.matmul %159, %160, %cst_62 {dimension_numbers = #tpu.dot_dimension_numbers<[1], [1], [0], [0], [0, 0, 1, 0], [], []>} : vector<8x8xf32>, vector<8x8xf32>, vector<8x8xf32> -> vector<8x8xf32>
    %163 = arith.addf %162, %0 : vector<8x8xf32>
    %cst_63 = arith.constant dense<0xFF800000> : vector<8xf32>
    %164 = vector.multi_reduction <maximumf>, %163, %cst_63 [1] : vector<8x8xf32> to vector<8xf32>
    %165 = vector.shape_cast %164 : vector<8xf32> to vector<8x1xf32>
    %166 = vector.broadcast %165 : vector<8x1xf32> to vector<8x8xf32>
    %167 = arith.subf %163, %166 : vector<8x8xf32>
    %168 = math.exp %167 : vector<8x8xf32>
    %cst_64 = arith.constant dense<0.000000e+00> : vector<8xf32>
    %169 = vector.multi_reduction <add>, %168, %cst_64 [1] : vector<8x8xf32> to vector<8xf32>
    %170 = vector.shape_cast %169 : vector<8xf32> to vector<8x1xf32>
    %171 = vector.broadcast %170 : vector<8x1xf32> to vector<8x8xf32>
    %172 = arith.divf %168, %171 : vector<8x8xf32>
    %cst_65 = arith.constant dense<0.000000e+00> : vector<8x8xf32>
    %173 = tpu.matmul %172, %161, %cst_65 {dimension_numbers = #tpu.dot_dimension_numbers<[1], [0], [0], [1], [0, 0, 1, 1], [], []>} : vector<8x8xf32>, vector<8x8xf32>, vector<8x8xf32> -> vector<8x8xf32>
    %174 = vector.extract_strided_slice %103 {offsets = [24, 0], sizes = [8, 32], strides = [1, 1]} : vector<32x32xf32> to vector<8x32xf32>
    %cst_66 = arith.constant dense<0.000000e+00> : vector<8x32xf32>
    %175 = tpu.matmul %173, %174, %cst_66 {dimension_numbers = #tpu.dot_dimension_numbers<[1], [0], [0], [1], [0, 0, 1, 1], [], []>} : vector<8x8xf32>, vector<8x32xf32>, vector<8x32xf32> -> vector<8x32xf32>
    %176 = arith.addf %158, %175 : vector<8x32xf32>
    %c1_67 = arith.constant 1 : index
    %c0_68 = arith.constant 0 : index
    %c0_69 = arith.constant 0 : index
    %177 = vector.load %arg6[%c1_67, %c0_68, %c0_69] : memref<2x1x32xf32, #tpu.memory_space<vmem>>, vector<1x1x32xf32>
    %178 = vector.shape_cast %177 : vector<1x1x32xf32> to vector<1x32xf32>
    %179 = vector.broadcast %178 : vector<1x32xf32> to vector<8x32xf32>
    %180 = arith.addf %176, %179 : vector<8x32xf32>
    %cst_70 = arith.constant dense<0.000000e+00> : vector<8xf32>
    %181 = vector.multi_reduction <add>, %180, %cst_70 [1] : vector<8x32xf32> to vector<8xf32>
    %182 = vector.shape_cast %181 : vector<8xf32> to vector<8x1xf32>
    %cst_71 = arith.constant 3.200000e+01 : f32
    %183 = vector.broadcast %cst_71 : f32 to vector<8x1xf32>
    %184 = arith.divf %182, %183 : vector<8x1xf32>
    %185 = vector.broadcast %184 : vector<8x1xf32> to vector<8x32xf32>
    %186 = arith.subf %180, %185 : vector<8x32xf32>
    %187 = arith.mulf %186, %186 : vector<8x32xf32>
    %cst_72 = arith.constant dense<0.000000e+00> : vector<8xf32>
    %188 = vector.multi_reduction <add>, %187, %cst_72 [1] : vector<8x32xf32> to vector<8xf32>
    %189 = vector.shape_cast %188 : vector<8xf32> to vector<8x1xf32>
    %cst_73 = arith.constant 0.0322580636 : f32
    %190 = vector.broadcast %cst_73 : f32 to vector<8x1xf32>
    %191 = arith.mulf %189, %190 : vector<8x1xf32>
    %192 = math.sqrt %191 : vector<8x1xf32>
    %c0_74 = arith.constant 0 : index
    %c0_75 = arith.constant 0 : index
    %193 = vector.load %arg7[%c0_74, %c0_75] : memref<1x32xf32, #tpu.memory_space<vmem>>, vector<1x32xf32>
    %cst_76 = arith.constant 9.99999997E-7 : f32
    %194 = vector.broadcast %cst_76 : f32 to vector<8x1xf32>
    %195 = arith.addf %192, %194 : vector<8x1xf32>
    %196 = vector.broadcast %195 : vector<8x1xf32> to vector<8x32xf32>
    %197 = arith.divf %186, %196 : vector<8x32xf32>
    %198 = vector.broadcast %193 : vector<1x32xf32> to vector<8x32xf32>
    %199 = arith.mulf %198, %197 : vector<8x32xf32>
    %c0_77 = arith.constant 0 : index
    %c0_78 = arith.constant 0 : index
    %200 = vector.load %arg8[%c0_77, %c0_78] : memref<1x32xf32, #tpu.memory_space<vmem>>, vector<1x32xf32>
    %201 = vector.broadcast %200 : vector<1x32xf32> to vector<8x32xf32>
    %202 = arith.addf %199, %201 : vector<8x32xf32>
    %c0_79 = arith.constant 0 : index
    %c0_80 = arith.constant 0 : index
    %c0_81 = arith.constant 0 : index
    %203 = vector.load %arg9[%c0_79, %c0_80, %c0_81] : memref<1x8x32xf32, #tpu.memory_space<vmem>>, vector<1x8x32xf32>
    %204 = vector.shape_cast %203 : vector<1x8x32xf32> to vector<8x32xf32>
    %205 = vector.shape_cast %202 : vector<8x32xf32> to vector<1x8x32xf32>
    tpu.vector_store %arg9[%c0_79, %c0_80, %c0_81], %205 {strides = array<i32>} : memref<1x8x32xf32, #tpu.memory_space<vmem>>, vector<1x8x32xf32>,
    return
  }
  func.func @transform_0(%arg0: i32) -> (i32, i32) {
    %c0_i32 = arith.constant 0 : i32
    %c0_i32_0 = arith.constant 0 : i32
    %c0_i32_1 = arith.constant 0 : i32
    return %c0_i32, %c0_i32_0 : i32, i32
  }
  func.func @transform_1(%arg0: i32) -> (i32, i32, i32) {
    %c0_i32 = arith.constant 0 : i32
    %c0_i32_0 = arith.constant 0 : i32
    %c0_i32_1 = arith.constant 0 : i32
    return %arg0, %c0_i32, %c0_i32_0 : i32, i32, i32
  }
  func.func @transform_2(%arg0: i32) -> (i32, i32, i32) {
    %c0_i32 = arith.constant 0 : i32
    %c0_i32_0 = arith.constant 0 : i32
    %c0_i32_1 = arith.constant 0 : i32
    %c0_i32_2 = arith.constant 0 : i32
    return %c0_i32, %c0_i32_0, %c0_i32_1 : i32, i32, i32
  }
  func.func @transform_3(%arg0: i32) -> (i32, i32, i32) {
    %c0_i32 = arith.constant 0 : i32
    %c0_i32_0 = arith.constant 0 : i32
    %c0_i32_1 = arith.constant 0 : i32
    %c0_i32_2 = arith.constant 0 : i32
    return %c0_i32, %c0_i32_0, %c0_i32_1 : i32, i32, i32
  }
  func.func @transform_4(%arg0: i32) -> (i32, i32, i32) {
    %c0_i32 = arith.constant 0 : i32
    %c0_i32_0 = arith.constant 0 : i32
    %c0_i32_1 = arith.constant 0 : i32
    %c0_i32_2 = arith.constant 0 : i32
    return %c0_i32, %c0_i32_0, %c0_i32_1 : i32, i32, i32
  }
  func.func @transform_5(%arg0: i32) -> (i32, i32, i32) {
    %c0_i32 = arith.constant 0 : i32
    %c0_i32_0 = arith.constant 0 : i32
    %c0_i32_1 = arith.constant 0 : i32
    %c0_i32_2 = arith.constant 0 : i32
    return %c0_i32, %c0_i32_0, %c0_i32_1 : i32, i32, i32
  }
  func.func @transform_6(%arg0: i32) -> (i32, i32) {
    %c0_i32 = arith.constant 0 : i32
    %c0_i32_0 = arith.constant 0 : i32
    %c0_i32_1 = arith.constant 0 : i32
    return %c0_i32, %c0_i32_0 : i32, i32
  }
  func.func @transform_7(%arg0: i32) -> (i32, i32) {
    %c0_i32 = arith.constant 0 : i32
    %c0_i32_0 = arith.constant 0 : i32
    %c0_i32_1 = arith.constant 0 : i32
    return %c0_i32, %c0_i32_0 : i32, i32
  }
  func.func @transform_8(%arg0: i32) -> (i32, i32, i32) {
    %c0_i32 = arith.constant 0 : i32
    %c0_i32_0 = arith.constant 0 : i32
    %c0_i32_1 = arith.constant 0 : i32
    return %arg0, %c0_i32, %c0_i32_0 : i32, i32, i32
  }
}

</mosaic_0001>

<llo_original>
// kernel: encoder_forward.1
$region0: #{encoder_forward.1}
  #allocation0 [shape = 'u32[]', space=smem, size = 0x4, offset = 0x4, fixed_abs, tag = 'smem constant byte address 0x4 - core index']
  #allocation1 [shape = 'u32[144,128]{1,0:T(1,128)}', space=vmem, size = 0x12000, scoped, tag = 'internal scratch']
  %s0 = inlined_call_operand.vmem [shape: f32[8,8], index: 0, kind: input, shape index: {}]
  %s1 = inlined_call_operand.vmem [shape: f32[2,8,32], index: 1, kind: input, shape index: {}]
  %s2 = inlined_call_operand.hbm [shape: f32[2,32,96], index: 2, kind: input, shape index: {}]
  %s3 = inlined_call_operand.vmem [shape: f32[2,1,96], index: 3, kind: input, shape index: {}]
  %s4 = inlined_call_operand.hbm [shape: f32[2,32,32], index: 4, kind: input, shape index: {}]
  %s5 = inlined_call_operand.vmem [shape: f32[2,1,32], index: 5, kind: input, shape index: {}]
  %s6 = inlined_call_operand.vmem [shape: f32[1,32], index: 6, kind: input, shape index: {}]
  %s7 = inlined_call_operand.hbm [shape: f32[1,32], index: 7, kind: input, shape index: {}]
  %s8 = inlined_call_operand.hbm [shape: f32[2,8,32], index: 8, kind: output, shape index: {}]
  %s9 = sld [smem:[#allocation0]]
  $region77: #{encoder_forward.1} parent=0
    _
  %s11 = ssub.s32 1, %s9
  %s12 = scalar_select 0, %s11, %s9
  $region1: #{encoder_forward.1} parent=0
    #allocation2 [shape = 'u8[32768]{0}', space=vmem, size = 0x8000, scoped, tag = 'input window, operand 2, single buffered']
    #allocation3 [shape = 's32[2]{0}', space=sflag, size = 0x8, scoped, tag = 'scoped memory for encoder_forward.1']
    #allocation4 [shape = 's32[2]{0}', space=sflag, size = 0x8, scoped, tag = 'scoped memory for encoder_forward.1']
    #allocation5 [shape = 'u8[32768]{0}', space=vmem, size = 0x8000, scoped, tag = 'input window, operand 4, single buffered']
    #allocation6 [shape = 's32[1]{0}', space=sflag, size = 0x4, scoped, tag = 'scoped memory for encoder_forward.1']
    #allocation7 [shape = 'u8[512]{0}', space=vmem, size = 0x400, scoped, tag = 'input window, operand 7, single buffered']
    #allocation8 [shape = 'u8[8192]{0}', space=vmem, size = 0x2000, scoped, tag = 'output window, operand 0']
    %13 = vsyncpa [#allocation3], 0
    %14 = vsyncpa [#allocation6], 0
    %15 = vsyncpa [#allocation4], 0
    %s16 = scalar_lea.sflag [#allocation4], 1
    %17 = vsyncpa %s16, 0
    loop: start=0, step=1, limit=4
    $region2: #{encoder_forward.1} parent=1 // loop_pre_header
      _
    $region3: #{encoder_forward.1} parent=1 // loop_header
      %s19 = sphi 0, %s23
      %p20 = scmp.ge.s32.totalorder %s19, 4
      %s27 = sphi 0, %s27
      %s29 = sphi 0, %s27
      %s30 = sphi 0, %s29
      %s44 = sphi 0, %s30
      %s50 = sphi 0, %s52
      %s53 = sphi 0, %s50
      %s54 = sphi 0, %s53
      %s70 = sphi 0, %s54
      %s74 = sphi 0, %s74
      %s76 = sphi 0, %s74
      %s77 = sphi 0, %s76
      %s91 = sphi 0, %s77
      %s95 = sphi 0, %s95
      %s97 = sphi 0, %s95
      %s98 = sphi 0, %s97
      %s112 = sphi 0, %s98
      %s116 = sphi 0, %s116
      %s118 = sphi 0, %s116
      %s119 = sphi 0, %s118
      %s133 = sphi 0, %s119
      %s137 = sphi 0, %s137
      %s139 = sphi 0, %s137
      %s140 = sphi 0, %s139
      %s154 = sphi 0, %s140
      %s158 = sphi 0, %s158
      %s160 = sphi 0, %s158
      %s161 = sphi 0, %s160
      %s175 = sphi 0, %s161
      %s179 = sphi 0, %s179
      %s181 = sphi 0, %s179
      %s182 = sphi 0, %s181
      %s196 = sphi 0, %s182
      %s202 = sphi 0, %s204
      %s205 = sphi 0, %s202
      %s206 = sphi 0, %s205
      %s222 = sphi 0, %s206
    $region4: #{encoder_forward.1} parent=1 // loop_header_branch
      %22 = sbr.rel (%p20) target = $region8
    $region5: #{encoder_forward.1} parent=1 // loop_body
      %s24 = ssub.s32 %s19, 1
      %s25 = ssub.s32 %s19, 2
      %s26 = sadd.s32 %s19, 1
      %s28 = sadd.s32 %s27, 1
      %p31 = scmp.eq.s32.totalorder %s19, 1
      %p32 = scmp.ne.s32.totalorder %s27, %s29
      %p33 = scmp.eq.s32.totalorder %s19, 0
      %p34 = por %p32, %p33
      %p35 = scmp.ne.s32.totalorder %s27, %s29
      %p36 = scmp.eq.s32.totalorder %s24, 1
      %p37 = por %p35, %p36
      %p38 = scmp.ne.s32.totalorder %s29, %s30
      %p39 = scmp.eq.s32.totalorder %s24, 0
      %p40 = por %p38, %p39
      %p41 = scmp.ne.s32.totalorder %s29, %s30
      %p42 = scmp.eq.s32.totalorder %s25, 1
      %p43 = por %p41, %p42
      %p45 = scmp.ne.s32.totalorder %s30, %s44
      %p46 = scmp.eq.s32.totalorder %s25, 0
      %p47 = por %p45, %p46
      %s48 = ssub.s32 %s19, %s26
      %p49 = scmp.eq.s32.totalorder %s48, 0
      %s51 = sadd.s32 %s50, 1
      %s52 = scalar_select %p49, %s50, %s51
      %p55 = pneg %p49
      %p56 = scmp.eq.s32.totalorder %s19, 1
      %p57 = por %p55, %p56
      %p58 = scmp.ne.s32.totalorder %s50, %s53
      %p59 = scmp.eq.s32.totalorder %s19, 0
      %p60 = por %p58, %p59
      %p61 = scmp.ne.s32.totalorder %s50, %s53
      %p62 = scmp.eq.s32.totalorder %s24, 1
      %p63 = por %p61, %p62
      %p64 = scmp.ne.s32.totalorder %s53, %s54
      %p65 = scmp.eq.s32.totalorder %s24, 0
      %p66 = por %p64, %p65
      %p67 = scmp.ne.s32.totalorder %s53, %s54
      %p68 = scmp.eq.s32.totalorder %s25, 1
      %p69 = por %p67, %p68
      %p71 = scmp.ne.s32.totalorder %s54, %s70
      %p72 = scmp.eq.s32.totalorder %s25, 0
      %p73 = por %p71, %p72
      %s75 = sadd.s32 %s74, 1
      %p78 = scmp.eq.s32.totalorder %s19, 1
      %p79 = scmp.ne.s32.totalorder %s74, %s76
      %p80 = scmp.eq.s32.totalorder %s19, 0
      %p81 = por %p79, %p80
      %p82 = scmp.ne.s32.totalorder %s74, %s76
      %p83 = scmp.eq.s32.totalorder %s24, 1
      %p84 = por %p82, %p83
      %p85 = scmp.ne.s32.totalorder %s76, %s77
      %p86 = scmp.eq.s32.totalorder %s24, 0
      %p87 = por %p85, %p86
      %p88 = scmp.ne.s32.totalorder %s76, %s77
      %p89 = scmp.eq.s32.totalorder %s25, 1
      %p90 = por %p88, %p89
      %p92 = scmp.ne.s32.totalorder %s77, %s91
      %p93 = scmp.eq.s32.totalorder %s25, 0
      %p94 = por %p92, %p93
      %s96 = sadd.s32 %s95, 1
      %p99 = scmp.eq.s32.totalorder %s19, 1
      %p100 = scmp.ne.s32.totalorder %s95, %s97
      %p101 = scmp.eq.s32.totalorder %s19, 0
      %p102 = por %p100, %p101
      %p103 = scmp.ne.s32.totalorder %s95, %s97
      %p104 = scmp.eq.s32.totalorder %s24, 1
      %p105 = por %p103, %p104
      %p106 = scmp.ne.s32.totalorder %s97, %s98
      %p107 = scmp.eq.s32.totalorder %s24, 0
      %p108 = por %p106, %p107
      %p109 = scmp.ne.s32.totalorder %s97, %s98
      %p110 = scmp.eq.s32.totalorder %s25, 1
      %p111 = por %p109, %p110
      %p113 = scmp.ne.s32.totalorder %s98, %s112
      %p114 = scmp.eq.s32.totalorder %s25, 0
      %p115 = por %p113, %p114
      %s117 = sadd.s32 %s116, 1
      %p120 = scmp.eq.s32.totalorder %s19, 1
      %p121 = scmp.ne.s32.totalorder %s116, %s118
      %p122 = scmp.eq.s32.totalorder %s19, 0
      %p123 = por %p121, %p122
      %p124 = scmp.ne.s32.totalorder %s116, %s118
      %p125 = scmp.eq.s32.totalorder %s24, 1
      %p126 = por %p124, %p125
      %p127 = scmp.ne.s32.totalorder %s118, %s119
      %p128 = scmp.eq.s32.totalorder %s24, 0
      %p129 = por %p127, %p128
      %p130 = scmp.ne.s32.totalorder %s118, %s119
      %p131 = scmp.eq.s32.totalorder %s25, 1
      %p132 = por %p130, %p131
      %p134 = scmp.ne.s32.totalorder %s119, %s133
      %p135 = scmp.eq.s32.totalorder %s25, 0
      %p136 = por %p134, %p135
      %s138 = sadd.s32 %s137, 1
      %p141 = scmp.eq.s32.totalorder %s19, 1
      %p142 = scmp.ne.s32.totalorder %s137, %s139
      %p143 = scmp.eq.s32.totalorder %s19, 0
      %p144 = por %p142, %p143
      %p145 = scmp.ne.s32.totalorder %s137, %s139
      %p146 = scmp.eq.s32.totalorder %s24, 1
      %p147 = por %p145, %p146
      %p148 = scmp.ne.s32.totalorder %s139, %s140
      %p149 = scmp.eq.s32.totalorder %s24, 0
      %p150 = por %p148, %p149
      %p151 = scmp.ne.s32.totalorder %s139, %s140
      %p152 = scmp.eq.s32.totalorder %s25, 1
      %p153 = por %p151, %p152
      %p155 = scmp.ne.s32.totalorder %s140, %s154
      %p156 = scmp.eq.s32.totalorder %s25, 0
      %p157 = por %p155, %p156
      %s159 = sadd.s32 %s158, 1
      %p162 = scmp.eq.s32.totalorder %s19, 1
      %p163 = scmp.ne.s32.totalorder %s158, %s160
      %p164 = scmp.eq.s32.totalorder %s19, 0
      %p165 = por %p163, %p164
      %p166 = scmp.ne.s32.totalorder %s158, %s160
      %p167 = scmp.eq.s32.totalorder %s24, 1
      %p168 = por %p166, %p167
      %p169 = scmp.ne.s32.totalorder %s160, %s161
      %p170 = scmp.eq.s32.totalorder %s24, 0
      %p171 = por %p169, %p170
      %p172 = scmp.ne.s32.totalorder %s160, %s161
      %p173 = scmp.eq.s32.totalorder %s25, 1
      %p174 = por %p172, %p173
      %p176 = scmp.ne.s32.totalorder %s161, %s175
      %p177 = scmp.eq.s32.totalorder %s25, 0
      %p178 = por %p176, %p177
      %s180 = sadd.s32 %s179, 1
      %p183 = scmp.eq.s32.totalorder %s19, 1
      %p184 = scmp.ne.s32.totalorder %s179, %s181
      %p185 = scmp.eq.s32.totalorder %s19, 0
      %p186 = por %p184, %p185
      %p187 = scmp.ne.s32.totalorder %s179, %s181
      %p188 = scmp.eq.s32.totalorder %s24, 1
      %p189 = por %p187, %p188
      %p190 = scmp.ne.s32.totalorder %s181, %s182
      %p191 = scmp.eq.s32.totalorder %s24, 0
      %p192 = por %p190, %p191
      %p193 = scmp.ne.s32.totalorder %s181, %s182
      %p194 = scmp.eq.s32.totalorder %s25, 1
      %p195 = por %p193, %p194
      %p197 = scmp.ne.s32.totalorder %s182, %s196
      %p198 = scmp.eq.s32.totalorder %s25, 0
      %p199 = por %p197, %p198
      %s200 = ssub.s32 %s19, %s26
      %p201 = scmp.eq.s32.totalorder %s200, 0
      %s203 = sadd.s32 %s202, 1
      %s204 = scalar_select %p201, %s202, %s203
      %p207 = pneg %p201
      %p208 = scmp.eq.s32.totalorder %s19, 1
      %p209 = por %p207, %p208
      %p210 = scmp.ne.s32.totalorder %s202, %s205
      %p211 = scmp.eq.s32.totalorder %s19, 0
      %p212 = por %p210, %p211
      %p213 = scmp.ne.s32.totalorder %s202, %s205
      %p214 = scmp.eq.s32.totalorder %s24, 1
      %p215 = por %p213, %p214
      %p216 = scmp.ne.s32.totalorder %s205, %s206
      %p217 = scmp.eq.s32.totalorder %s24, 0
      %p218 = por %p216, %p217
      %p219 = scmp.ne.s32.totalorder %s205, %s206
      %p220 = scmp.eq.s32.totalorder %s25, 1
      %p221 = por %p219, %p220
      %p223 = scmp.ne.s32.totalorder %s206, %s222
      %p224 = scmp.eq.s32.totalorder %s25, 0
      %p225 = por %p223, %p224
      %p226 = scmp.le.s32.totalorder 1, %s19
      %p227 = scmp.lt.s32.totalorder %s19, 3
      %p228 = pnand %p226, %p227
      %p229 = pneg %p228
      // Predicated region
      $region9: #{encoder_forward.1} parent=5 // pred_check
        _
      $region10: #{encoder_forward.1} parent=5 // pred_check_branch
        %231 = sbr.rel (%p228) target = $region12
      $region11: #{encoder_forward.1} parent=5 // pred_region
        %s232 = ssub.s32 %s19, 1
        // Predicated region
        $region13: #{encoder_forward.1} parent=11 // pred_check
          %p233 = pneg %p40
        $region14: #{encoder_forward.1} parent=11 // pred_check_branch
          %235 = sbr.rel (%p233) target = $region16
        $region15: #{encoder_forward.1} parent=11 // pred_region
          _
        $region16: #{encoder_forward.1} parent=11 // pred_fallthru
          _
        // Predicated region
        $region17: #{encoder_forward.1} parent=11 // pred_check
          %p236 = pneg %p87
        $region18: #{encoder_forward.1} parent=11 // pred_check_branch
          %238 = sbr.rel (%p236) target = $region20
        $region19: #{encoder_forward.1} parent=11 // pred_region
          %s240 = ssub.s32 1024, 1024
          %241 = vsyncadd [#allocation3], %s240
          %s242 = sshll.u32 [#allocation2], 4
          %s243 = int_to_ptr.vmem [resolvable:$true] %s242
          %248 = dma.hbm_to_vmem [thread:$0]  %s2, 1024, %s243, [#allocation3], 128, 128, 8
        $region20: #{encoder_forward.1} parent=11 // pred_fallthru
          _
        // Predicated region
        $region21: #{encoder_forward.1} parent=11 // pred_check
          %p249 = pneg %p108
        $region22: #{encoder_forward.1} parent=11 // pred_check_branch
          %251 = sbr.rel (%p249) target = $region24
        $region23: #{encoder_forward.1} parent=11 // pred_region
          _
        $region24: #{encoder_forward.1} parent=11 // pred_fallthru
          _
        // Predicated region
        $region25: #{encoder_forward.1} parent=11 // pred_check
          %p252 = pneg %p129
        $region26: #{encoder_forward.1} parent=11 // pred_check_branch
          %254 = sbr.rel (%p252) target = $region28
        $region27: #{encoder_forward.1} parent=11 // pred_region
          %s256 = ssub.s32 1024, 1024
          %257 = vsyncadd [#allocation6], %s256
          %s258 = sshll.u32 [#allocation5], 4
          %s259 = int_to_ptr.vmem [resolvable:$true] %s258
          %264 = dma.hbm_to_vmem [thread:$0]  %s4, 1024, %s259, [#allocation6], 128, 128, 8
        $region28: #{encoder_forward.1} parent=11 // pred_fallthru
          _
        // Predicated region
        $region29: #{encoder_forward.1} parent=11 // pred_check
          %p265 = pneg %p150
        $region30: #{encoder_forward.1} parent=11 // pred_check_branch
          %267 = sbr.rel (%p265) target = $region32
        $region31: #{encoder_forward.1} parent=11 // pred_region
          _
        $region32: #{encoder_forward.1} parent=11 // pred_fallthru
          _
        // Predicated region
        $region33: #{encoder_forward.1} parent=11 // pred_check
          %p268 = pneg %p171
        $region34: #{encoder_forward.1} parent=11 // pred_check_branch
          %270 = sbr.rel (%p268) target = $region36
        $region35: #{encoder_forward.1} parent=11 // pred_region
          _
        $region36: #{encoder_forward.1} parent=11 // pred_fallthru
          _
        // Predicated region
        $region37: #{encoder_forward.1} parent=11 // pred_check
          %p271 = pneg %p192
        $region38: #{encoder_forward.1} parent=11 // pred_check_branch
          %273 = sbr.rel (%p271) target = $region40
        $region39: #{encoder_forward.1} parent=11 // pred_region
          %s275 = ssub.s32 16, 16
          %276 = vsyncadd [#allocation6], %s275
          %s278 = sshll.u32 [#allocation7], 4
          %s279 = int_to_ptr.vmem [resolvable:$true] %s278
          %281 = dma.hbm_to_vmem [thread:$0]  %s7, 16, %s279, [#allocation6]
        $region40: #{encoder_forward.1} parent=11 // pred_fallthru
          _
      $region12: #{encoder_forward.1} parent=5 // pred_fallthru
        _
      %p282 = scmp.lt.s32.totalorder %s19, 2
      // Predicated region
      $region41: #{encoder_forward.1} parent=5 // pred_check
        %p283 = pneg %p282
      $region42: #{encoder_forward.1} parent=5 // pred_check_branch
        %285 = sbr.rel (%p283) target = $region44
      $region43: #{encoder_forward.1} parent=5 // pred_region
        // Predicated region
        $region45: #{encoder_forward.1} parent=43 // pred_check
          %p286 = pneg %p60
        $region46: #{encoder_forward.1} parent=43 // pred_check_branch
          %288 = sbr.rel (%p286) target = $region48
        $region47: #{encoder_forward.1} parent=43 // pred_region
          %p289 = scmp.lt.s32.totalorder %s19, 1
          %s290 = scalar_select %p289, %s19, 1
          %s291 = smul.addr %s290, 8
          %s292 = scalar_lea.vmem %s1, %s291
        $region48: #{encoder_forward.1} parent=43 // pred_fallthru
          _
      $region44: #{encoder_forward.1} parent=5 // pred_fallthru
        _
      %p293 = scmp.le.s32.totalorder 1, %s19
      %p294 = scmp.lt.s32.totalorder %s19, 3
      %p295 = pnand %p293, %p294
      %p296 = pneg %p295
      // Predicated region
      $region49: #{encoder_forward.1} parent=5 // pred_check
        _
      $region50: #{encoder_forward.1} parent=5 // pred_check_branch
        %298 = sbr.rel (%p295) target = $region52
      $region51: #{encoder_forward.1} parent=5 // pred_region
        %s299 = ssub.s32 %s19, 1
        // Predicated region
        $region53: #{encoder_forward.1} parent=51 // pred_check
          %p300 = pneg %p87
        $region54: #{encoder_forward.1} parent=51 // pred_check_branch
          %302 = sbr.rel (%p300) target = $region56
        $region55: #{encoder_forward.1} parent=51 // pred_region
          %303 = dma.done [#allocation3], 1024
        $region56: #{encoder_forward.1} parent=51 // pred_fallthru
          _
        // Predicated region
        $region57: #{encoder_forward.1} parent=51 // pred_check
          %p304 = pneg %p129
        $region58: #{encoder_forward.1} parent=51 // pred_check_branch
          %306 = sbr.rel (%p304) target = $region60
        $region59: #{encoder_forward.1} parent=51 // pred_region
          %307 = dma.done [#allocation6], 1024
        $region60: #{encoder_forward.1} parent=51 // pred_fallthru
          _
        // Predicated region
        $region61: #{encoder_forward.1} parent=51 // pred_check
          %p308 = pneg %p192
        $region62: #{encoder_forward.1} parent=51 // pred_check_branch
          %310 = sbr.rel (%p308) target = $region64
        $region63: #{encoder_forward.1} parent=51 // pred_region
          %311 = dma.done [#allocation6], 16
        $region64: #{encoder_forward.1} parent=51 // pred_fallthru
          _
        %p312 = pneg %p40
        %p313 = pneg %p37
        %p314 = scmp.lt.s32.totalorder %s24, 1
        %s315 = scalar_select %p314, %s24, 1
        %s316 = smul.addr %s315, 8
        %s317 = scalar_lea.vmem %s1, %s316
        %p318 = pneg %p66
        %p319 = pneg %p63
        %p320 = pneg %p87
        %p321 = pneg %p84
        %p322 = pneg %p108
        %p323 = pneg %p105
        %p324 = pneg %p129
        %p325 = pneg %p126
        %p326 = pneg %p150
        %p327 = pneg %p147
        %p328 = pneg %p171
        %p329 = pneg %p168
        %p330 = pneg %p192
        %p331 = pneg %p189
        %p332 = pneg %p218
        %p333 = pneg %p215
        %s334 = sand.u32 %s205, 1
        %s335 = scalar_lea.sflag [#allocation4], %s334
        %s336 = sand.u32 %s205, 1
        %s337 = smul.addr %s336, 8
        %s338 = scalar_lea.vmem [#allocation8], %s337
        %p339 = scmp.lt.s32.totalorder %s24, 1
        %s340 = scalar_select %p339, %s24, 1
        %s341 = smul.addr %s340, 8
        %s342 = scalar_lea.vmem %s1, %s341
        %v343 = vld [vmem:[%s0] sm:$0xff]
        %v344 = vld [vmem:[%s342] sm:$0xff]
        %v345 = vld [vmem:[#allocation2] sm:$0xff]
        %v346 = vld [vmem:[#allocation2 + $0x8] sm:$0xff]
        %v347 = vld [vmem:[#allocation2 + $0x10] sm:$0xff]
        %v348 = vld [vmem:[#allocation2 + $0x18] sm:$0xff]
        %v349 = vld [vmem:[%s3] sm:$0x1]
        %v351 = vlaneseq
        %v352 = vshrl.u32 %v351, 7
        %v353 = vsub.s32 0, %v352
        %v354 = vrot.slane %v349, %v353
        %vm356 = vcmask 261120
        %v358 = vsel %vm356, %v344, 0
        %360 = vmatprep.subr.mxu0 0.0
        %361 = vmatpush1.msra.mxu0 0.0
        %362 = vmatprep.subr.mxu0 0.0
        %363 = vmatpush1.msra.mxu0 0.0
        %364 = vmatprep.subr.mxu0 0.0
        %365 = vmatpush1.msra.mxu0 0.0
        %366 = vmatprep.subr.mxu0 0.0
        %367 = vmatpush1.msra.mxu0 0.0
        %368 = vmatprep.subr.mxu0 0.0
        %369 = vmatpush1.msra.mxu0 0.0
        %370 = vmatprep.subr.mxu0 0.0
        %371 = vmatpush1.msra.mxu0 0.0
        %372 = vmatprep.subr.mxu0 0.0
        %373 = vmatpush1.msra.mxu0 0.0
        %374 = vmatprep.subr.mxu0 0.0
        %375 = vmatpush1.msra.mxu0 0.0
        %376 = vmatprep.subr.mxu0 0.0
        %377 = vmatpush1.msra.mxu0 0.0
        %378 = vmatprep.subr.mxu0 0.0
        %379 = vmatpush1.msra.mxu0 0.0
        %380 = vmatprep.subr.mxu0 0.0
        %381 = vmatpush1.msra.mxu0 0.0
        %382 = vmatprep.subr.mxu0 0.0
        %383 = vmatpush1.msra.mxu0 0.0
        %384 = vmatprep.subr.mxu0 0.0
        %385 = vmatpush1.msra.mxu0 %v348
        %386 = vmatprep.subr.mxu0 0.0
        %387 = vmatpush1.msra.mxu0 %v347
        %388 = vmatprep.subr.mxu0 0.0
        %389 = vmatpush1.msra.mxu0 %v346
        %390 = vmatprep.subr.mxu0 0.0
        %391 = vmatpush1.msra.mxu0 %v345
        %392 = vmatprep.subr.mxu0 0.0
        %393 = vmatpush2.msra.mxu0 0.0
        %394 = vmatprep.subr.mxu0 0.0
        %395 = vmatpush2.msra.mxu0 0.0
        %396 = vmatprep.subr.mxu0 0.0
        %397 = vmatpush2.msra.mxu0 0.0
        %398 = vmatprep.subr.mxu0 0.0
        %399 = vmatpush2.msra.mxu0 0.0
        %400 = vmatprep.subr.mxu0 0.0
        %401 = vmatpush2.msra.mxu0 0.0
        %402 = vmatprep.subr.mxu0 0.0
        %403 = vmatpush2.msra.mxu0 0.0
        %404 = vmatprep.subr.mxu0 0.0
        %405 = vmatpush2.msra.mxu0 0.0
        %406 = vmatprep.subr.mxu0 0.0
        %407 = vmatpush2.msra.mxu0 0.0
        %408 = vmatprep.subr.mxu0 0.0
        %409 = vmatpush2.msra.mxu0 0.0
        %410 = vmatprep.subr.mxu0 0.0
        %411 = vmatpush2.msra.mxu0 0.0
        %412 = vmatprep.subr.mxu0 0.0
        %413 = vmatpush2.msra.mxu0 0.0
        %414 = vmatprep.subr.mxu0 0.0
        %415 = vmatpush2.msra.mxu0 0.0
        %416 = vmatprep.subr.mxu0 0.0
        %417 = vmatpush2.msra.mxu0 0.0
        %418 = vmatprep.subr.mxu0 0.0
        %419 = vmatpush2.msra.mxu0 0.0
        %420 = vmatprep.subr.mxu0 0.0
        %421 = vmatpush2.msra.mxu0 0.0
        %422 = vmatprep.subr.mxu0 0.0
        %423 = vmatpush2.msra.mxu0 0.0
        %424 = vmatprep.mubr.f32.mxu0 0.0
        %425 = vmatmul.mubr.f32.gmra.mxu0 %v358
        %v426 = vpop.f32.mrf.mxu0
        %v427 = vadd.f32 %v354, %v426
        %v428 = vpop.f32.mrf.mxu0
        %429 = vdwg.mxu0
        %v430 = vld [vmem:[#allocation5] sm:$0xff]
        %v431 = vld [vmem:[#allocation5 + $0x8] sm:$0xff]
        %v432 = vld [vmem:[#allocation5 + $0x10] sm:$0xff]
        %v433 = vld [vmem:[#allocation5 + $0x18] sm:$0xff]
        %435 = vrot.lane.b32.xlu0 %v427, 96
        %v436 = vpop.permute.xlu0 %435
        %vm437 = vcmask 64512
        %v438 = vsel %vm437, %v427, 0
        %v440 = vsel %vm437, %v436, 0
        %442 = vmatprep.subr.mxu0 0.0
        %443 = vmatpush1.xpose.msra.mxu0 0.0
        %444 = vmatprep.subr.mxu0 0.0
        %445 = vmatpush1.xpose.msra.mxu0 0.0
        %446 = vmatprep.subr.mxu0 0.0
        %447 = vmatpush1.xpose.msra.mxu0 0.0
        %448 = vmatprep.subr.mxu0 0.0
        %449 = vmatpush1.xpose.msra.mxu0 0.0
        %450 = vmatprep.subr.mxu0 0.0
        %451 = vmatpush1.xpose.msra.mxu0 0.0
        %452 = vmatprep.subr.mxu0 0.0
        %453 = vmatpush1.xpose.msra.mxu0 0.0
        %454 = vmatprep.subr.mxu0 0.0
        %455 = vmatpush1.xpose.msra.mxu0 0.0
        %456 = vmatprep.subr.mxu0 0.0
        %457 = vmatpush1.xpose.msra.mxu0 0.0
        %458 = vmatprep.subr.mxu0 0.0
        %459 = vmatpush1.xpose.msra.mxu0 0.0
        %460 = vmatprep.subr.mxu0 0.0
        %461 = vmatpush1.xpose.msra.mxu0 0.0
        %462 = vmatprep.subr.mxu0 0.0
        %463 = vmatpush1.xpose.msra.mxu0 0.0
        %464 = vmatprep.subr.mxu0 0.0
        %465 = vmatpush1.xpose.msra.mxu0 0.0
        %466 = vmatprep.subr.mxu0 0.0
        %467 = vmatpush1.xpose.msra.mxu0 0.0
        %468 = vmatprep.subr.mxu0 0.0
        %469 = vmatpush1.xpose.msra.mxu0 0.0
        %470 = vmatprep.subr.mxu0 0.0
        %471 = vmatpush1.xpose.msra.mxu0 0.0
        %472 = vmatprep.subr.mxu0 0.0
        %473 = vmatpush1.xpose.msra.mxu0 %v440
        %474 = vmatprep.subr.mxu0 0.0
        %475 = vmatpush2.xpose.msra.mxu0 0.0
        %476 = vmatprep.subr.mxu0 0.0
        %477 = vmatpush2.xpose.msra.mxu0 0.0
        %478 = vmatprep.subr.mxu0 0.0
        %479 = vmatpush2.xpose.msra.mxu0 0.0
        %480 = vmatprep.subr.mxu0 0.0
        %481 = vmatpush2.xpose.msra.mxu0 0.0
        %482 = vmatprep.subr.mxu0 0.0
        %483 = vmatpush2.xpose.msra.mxu0 0.0
        %484 = vmatprep.subr.mxu0 0.0
        %485 = vmatpush2.xpose.msra.mxu0 0.0
        %486 = vmatprep.subr.mxu0 0.0
        %487 = vmatpush2.xpose.msra.mxu0 0.0
        %488 = vmatprep.subr.mxu0 0.0
        %489 = vmatpush2.xpose.msra.mxu0 0.0
        %490 = vmatprep.subr.mxu0 0.0
        %491 = vmatpush2.xpose.msra.mxu0 0.0
        %492 = vmatprep.subr.mxu0 0.0
        %493 = vmatpush2.xpose.msra.mxu0 0.0
        %494 = vmatprep.subr.mxu0 0.0
        %495 = vmatpush2.xpose.msra.mxu0 0.0
        %496 = vmatprep.subr.mxu0 0.0
        %497 = vmatpush2.xpose.msra.mxu0 0.0
        %498 = vmatprep.subr.mxu0 0.0
        %499 = vmatpush2.xpose.msra.mxu0 0.0
        %500 = vmatprep.subr.mxu0 0.0
        %501 = vmatpush2.xpose.msra.mxu0 0.0
        %502 = vmatprep.subr.mxu0 0.0
        %503 = vmatpush2.xpose.msra.mxu0 0.0
        %504 = vmatprep.subr.mxu0 0.0
        %505 = vmatpush2.xpose.msra.mxu0 0.0
        %506 = vmatprep.mubr.f32.mxu0 0.0
        %507 = vmatmul.mubr.f32.gmra.mxu0 %v438
        %v508 = vpop.f32.mrf.mxu0
        %v509 = vadd.f32 %v343, %v508
        %v510 = vpop.f32.mrf.mxu0
        %511 = vdwg.mxu0
        %v512 = vsel %vm437, %v509, -inf
        %513 = vmax.xlane.f32.xlu0 %v512
        %v514 = vpop.xlane.xlu0 %513
        %v515 = vsub.f32 %v509, %v514
        %v516 = vmul.f32 %v515, 1.442695
        %v517 = vpow.pop %v516
        %v518 = vsel %vm437, %v517, 0.0
        %519 = vadd.xlane.f32.xlu0 %v518
        %v520 = vpop.xlane.xlu0 %519
        %v521 = vrcp.pop %v520
        %v522 = vmul.f32 %v517, %v521
        %523 = vrot.lane.b32.xlu0 %v427, 64
        %v524 = vpop.permute.xlu0 %523
        %v527 = vsel %vm437, %v522, 0
        %529 = vmatprep.subr.mxu0 0.0
        %530 = vmatpush1.msra.mxu0 0.0
        %531 = vmatprep.subr.mxu0 0.0
        %532 = vmatpush1.msra.mxu0 0.0
        %533 = vmatprep.subr.mxu0 0.0
        %534 = vmatpush1.msra.mxu0 0.0
        %535 = vmatprep.subr.mxu0 0.0
        %536 = vmatpush1.msra.mxu0 0.0
        %537 = vmatprep.subr.mxu0 0.0
        %538 = vmatpush1.msra.mxu0 0.0
        %539 = vmatprep.subr.mxu0 0.0
        %540 = vmatpush1.msra.mxu0 0.0
        %541 = vmatprep.subr.mxu0 0.0
        %542 = vmatpush1.msra.mxu0 0.0
        %543 = vmatprep.subr.mxu0 0.0
        %544 = vmatpush1.msra.mxu0 0.0
        %545 = vmatprep.subr.mxu0 0.0
        %546 = vmatpush1.msra.mxu0 0.0
        %547 = vmatprep.subr.mxu0 0.0
        %548 = vmatpush1.msra.mxu0 0.0
        %549 = vmatprep.subr.mxu0 0.0
        %550 = vmatpush1.msra.mxu0 0.0
        %551 = vmatprep.subr.mxu0 0.0
        %552 = vmatpush1.msra.mxu0 0.0
        %553 = vmatprep.subr.mxu0 0.0
        %554 = vmatpush1.msra.mxu0 0.0
        %555 = vmatprep.subr.mxu0 0.0
        %556 = vmatpush1.msra.mxu0 0.0
        %557 = vmatprep.subr.mxu0 0.0
        %558 = vmatpush1.msra.mxu0 0.0
        %559 = vmatprep.subr.mxu0 0.0
        %560 = vmatpush1.msra.mxu0 %v524
        %561 = vmatprep.subr.mxu0 0.0
        %562 = vmatpush2.msra.mxu0 0.0
        %563 = vmatprep.subr.mxu0 0.0
        %564 = vmatpush2.msra.mxu0 0.0
        %565 = vmatprep.subr.mxu0 0.0
        %566 = vmatpush2.msra.mxu0 0.0
        %567 = vmatprep.subr.mxu0 0.0
        %568 = vmatpush2.msra.mxu0 0.0
        %569 = vmatprep.subr.mxu0 0.0
        %570 = vmatpush2.msra.mxu0 0.0
        %571 = vmatprep.subr.mxu0 0.0
        %572 = vmatpush2.msra.mxu0 0.0
        %573 = vmatprep.subr.mxu0 0.0
        %574 = vmatpush2.msra.mxu0 0.0
        %575 = vmatprep.subr.mxu0 0.0
        %576 = vmatpush2.msra.mxu0 0.0
        %577 = vmatprep.subr.mxu0 0.0
        %578 = vmatpush2.msra.mxu0 0.0
        %579 = vmatprep.subr.mxu0 0.0
        %580 = vmatpush2.msra.mxu0 0.0
        %581 = vmatprep.subr.mxu0 0.0
        %582 = vmatpush2.msra.mxu0 0.0
        %583 = vmatprep.subr.mxu0 0.0
        %584 = vmatpush2.msra.mxu0 0.0
        %585 = vmatprep.subr.mxu0 0.0
        %586 = vmatpush2.msra.mxu0 0.0
        %587 = vmatprep.subr.mxu0 0.0
        %588 = vmatpush2.msra.mxu0 0.0
        %589 = vmatprep.subr.mxu0 0.0
        %590 = vmatpush2.msra.mxu0 0.0
        %591 = vmatprep.subr.mxu0 0.0
        %592 = vmatpush2.msra.mxu0 0.0
        %593 = vmatprep.mubr.f32.mxu0 0.0
        %594 = vmatmul.mubr.f32.gmra.mxu0 %v527
        %v595 = vpop.f32.mrf.mxu0
        %v596 = vadd.f32 0.0, %v595
        %v597 = vpop.f32.mrf.mxu0
        %598 = vdwg.mxu0
        %599 = vrot.lane.b32.xlu0 %v427, 120
        %v600 = vpop.permute.xlu0 %599
        %601 = vrot.lane.b32.xlu0 %v427, 88
        %v602 = vpop.permute.xlu0 %601
        %v603 = vsel %vm437, %v600, 0
        %v605 = vsel %vm437, %v602, 0
        %607 = vmatprep.subr.mxu0 0.0
        %608 = vmatpush1.xpose.msra.mxu0 0.0
        %609 = vmatprep.subr.mxu0 0.0
        %610 = vmatpush1.xpose.msra.mxu0 0.0
        %611 = vmatprep.subr.mxu0 0.0
        %612 = vmatpush1.xpose.msra.mxu0 0.0
        %613 = vmatprep.subr.mxu0 0.0
        %614 = vmatpush1.xpose.msra.mxu0 0.0
        %615 = vmatprep.subr.mxu0 0.0
        %616 = vmatpush1.xpose.msra.mxu0 0.0
        %617 = vmatprep.subr.mxu0 0.0
        %618 = vmatpush1.xpose.msra.mxu0 0.0
        %619 = vmatprep.subr.mxu0 0.0
        %620 = vmatpush1.xpose.msra.mxu0 0.0
        %621 = vmatprep.subr.mxu0 0.0
        %622 = vmatpush1.xpose.msra.mxu0 0.0
        %623 = vmatprep.subr.mxu0 0.0
        %624 = vmatpush1.xpose.msra.mxu0 0.0
        %625 = vmatprep.subr.mxu0 0.0
        %626 = vmatpush1.xpose.msra.mxu0 0.0
        %627 = vmatprep.subr.mxu0 0.0
        %628 = vmatpush1.xpose.msra.mxu0 0.0
        %629 = vmatprep.subr.mxu0 0.0
        %630 = vmatpush1.xpose.msra.mxu0 0.0
        %631 = vmatprep.subr.mxu0 0.0
        %632 = vmatpush1.xpose.msra.mxu0 0.0
        %633 = vmatprep.subr.mxu0 0.0
        %634 = vmatpush1.xpose.msra.mxu0 0.0
        %635 = vmatprep.subr.mxu0 0.0
        %636 = vmatpush1.xpose.msra.mxu0 0.0
        %637 = vmatprep.subr.mxu0 0.0
        %638 = vmatpush1.xpose.msra.mxu0 %v605
        %639 = vmatprep.subr.mxu0 0.0
        %640 = vmatpush2.xpose.msra.mxu0 0.0
        %641 = vmatprep.subr.mxu0 0.0
        %642 = vmatpush2.xpose.msra.mxu0 0.0
        %643 = vmatprep.subr.mxu0 0.0
        %644 = vmatpush2.xpose.msra.mxu0 0.0
        %645 = vmatprep.subr.mxu0 0.0
        %646 = vmatpush2.xpose.msra.mxu0 0.0
        %647 = vmatprep.subr.mxu0 0.0
        %648 = vmatpush2.xpose.msra.mxu0 0.0
        %649 = vmatprep.subr.mxu0 0.0
        %650 = vmatpush2.xpose.msra.mxu0 0.0
        %651 = vmatprep.subr.mxu0 0.0
        %652 = vmatpush2.xpose.msra.mxu0 0.0
        %653 = vmatprep.subr.mxu0 0.0
        %654 = vmatpush2.xpose.msra.mxu0 0.0
        %655 = vmatprep.subr.mxu0 0.0
        %656 = vmatpush2.xpose.msra.mxu0 0.0
        %657 = vmatprep.subr.mxu0 0.0
        %658 = vmatpush2.xpose.msra.mxu0 0.0
        %659 = vmatprep.subr.mxu0 0.0
        %660 = vmatpush2.xpose.msra.mxu0 0.0
        %661 = vmatprep.subr.mxu0 0.0
        %662 = vmatpush2.xpose.msra.mxu0 0.0
        %663 = vmatprep.subr.mxu0 0.0
        %664 = vmatpush2.xpose.msra.mxu0 0.0
        %665 = vmatprep.subr.mxu0 0.0
        %666 = vmatpush2.xpose.msra.mxu0 0.0
        %667 = vmatprep.subr.mxu0 0.0
        %668 = vmatpush2.xpose.msra.mxu0 0.0
        %669 = vmatprep.subr.mxu0 0.0
        %670 = vmatpush2.xpose.msra.mxu0 0.0
        %671 = vmatprep.mubr.f32.mxu0 0.0
        %672 = vmatmul.mubr.f32.gmra.mxu0 %v603
        %v673 = vpop.f32.mrf.mxu0
        %v674 = vadd.f32 %v343, %v673
        %v675 = vpop.f32.mrf.mxu0
        %676 = vdwg.mxu0
        %v677 = vsel %vm437, %v674, -inf
        %678 = vmax.xlane.f32.xlu0 %v677
        %v679 = vpop.xlane.xlu0 %678
        %v680 = vsub.f32 %v674, %v679
        %v681 = vmul.f32 %v680, 1.442695
        %v682 = vpow.pop %v681
        %v683 = vsel %vm437, %v682, 0.0
        %684 = vadd.xlane.f32.xlu0 %v683
        %v685 = vpop.xlane.xlu0 %684
        %v686 = vrcp.pop %v685
        %v687 = vmul.f32 %v682, %v686
        %688 = vrot.lane.b32.xlu0 %v427, 56
        %v689 = vpop.permute.xlu0 %688
        %v692 = vsel %vm437, %v687, 0
        %694 = vmatprep.subr.mxu0 0.0
        %695 = vmatpush1.msra.mxu0 0.0
        %696 = vmatprep.subr.mxu0 0.0
        %697 = vmatpush1.msra.mxu0 0.0
        %698 = vmatprep.subr.mxu0 0.0
        %699 = vmatpush1.msra.mxu0 0.0
        %700 = vmatprep.subr.mxu0 0.0
        %701 = vmatpush1.msra.mxu0 0.0
        %702 = vmatprep.subr.mxu0 0.0
        %703 = vmatpush1.msra.mxu0 0.0
        %704 = vmatprep.subr.mxu0 0.0
        %705 = vmatpush1.msra.mxu0 0.0
        %706 = vmatprep.subr.mxu0 0.0
        %707 = vmatpush1.msra.mxu0 0.0
        %708 = vmatprep.subr.mxu0 0.0
        %709 = vmatpush1.msra.mxu0 0.0
        %710 = vmatprep.subr.mxu0 0.0
        %711 = vmatpush1.msra.mxu0 0.0
        %712 = vmatprep.subr.mxu0 0.0
        %713 = vmatpush1.msra.mxu0 0.0
        %714 = vmatprep.subr.mxu0 0.0
        %715 = vmatpush1.msra.mxu0 0.0
        %716 = vmatprep.subr.mxu0 0.0
        %717 = vmatpush1.msra.mxu0 0.0
        %718 = vmatprep.subr.mxu0 0.0
        %719 = vmatpush1.msra.mxu0 0.0
        %720 = vmatprep.subr.mxu0 0.0
        %721 = vmatpush1.msra.mxu0 0.0
        %722 = vmatprep.subr.mxu0 0.0
        %723 = vmatpush1.msra.mxu0 0.0
        %724 = vmatprep.subr.mxu0 0.0
        %725 = vmatpush1.msra.mxu0 %v689
        %726 = vmatprep.subr.mxu0 0.0
        %727 = vmatpush2.msra.mxu0 0.0
        %728 = vmatprep.subr.mxu0 0.0
        %729 = vmatpush2.msra.mxu0 0.0
        %730 = vmatprep.subr.mxu0 0.0
        %731 = vmatpush2.msra.mxu0 0.0
        %732 = vmatprep.subr.mxu0 0.0
        %733 = vmatpush2.msra.mxu0 0.0
        %734 = vmatprep.subr.mxu0 0.0
        %735 = vmatpush2.msra.mxu0 0.0
        %736 = vmatprep.subr.mxu0 0.0
        %737 = vmatpush2.msra.mxu0 0.0
        %738 = vmatprep.subr.mxu0 0.0
        %739 = vmatpush2.msra.mxu0 0.0
        %740 = vmatprep.subr.mxu0 0.0
        %741 = vmatpush2.msra.mxu0 0.0
        %742 = vmatprep.subr.mxu0 0.0
        %743 = vmatpush2.msra.mxu0 0.0
        %744 = vmatprep.subr.mxu0 0.0
        %745 = vmatpush2.msra.mxu0 0.0
        %746 = vmatprep.subr.mxu0 0.0
        %747 = vmatpush2.msra.mxu0 0.0
        %748 = vmatprep.subr.mxu0 0.0
        %749 = vmatpush2.msra.mxu0 0.0
        %750 = vmatprep.subr.mxu0 0.0
        %751 = vmatpush2.msra.mxu0 0.0
        %752 = vmatprep.subr.mxu0 0.0
        %753 = vmatpush2.msra.mxu0 0.0
        %754 = vmatprep.subr.mxu0 0.0
        %755 = vmatpush2.msra.mxu0 0.0
        %756 = vmatprep.subr.mxu0 0.0
        %757 = vmatpush2.msra.mxu0 0.0
        %758 = vmatprep.mubr.f32.mxu0 0.0
        %759 = vmatmul.mubr.f32.gmra.mxu0 %v692
        %v760 = vpop.f32.mrf.mxu0
        %v761 = vadd.f32 0.0, %v760
        %v762 = vpop.f32.mrf.mxu0
        %763 = vdwg.mxu0
        %v765 = vsel %vm437, %v761, 0
        %767 = vmatprep.subr.mxu0 0.0
        %768 = vmatpush1.msra.mxu0 0.0
        %769 = vmatprep.subr.mxu0 0.0
        %770 = vmatpush1.msra.mxu0 0.0
        %771 = vmatprep.subr.mxu0 0.0
        %772 = vmatpush1.msra.mxu0 0.0
        %773 = vmatprep.subr.mxu0 0.0
        %774 = vmatpush1.msra.mxu0 0.0
        %775 = vmatprep.subr.mxu0 0.0
        %776 = vmatpush1.msra.mxu0 0.0
        %777 = vmatprep.subr.mxu0 0.0
        %778 = vmatpush1.msra.mxu0 0.0
        %779 = vmatprep.subr.mxu0 0.0
        %780 = vmatpush1.msra.mxu0 0.0
        %781 = vmatprep.subr.mxu0 0.0
        %782 = vmatpush1.msra.mxu0 0.0
        %783 = vmatprep.subr.mxu0 0.0
        %784 = vmatpush1.msra.mxu0 0.0
        %785 = vmatprep.subr.mxu0 0.0
        %786 = vmatpush1.msra.mxu0 0.0
        %787 = vmatprep.subr.mxu0 0.0
        %788 = vmatpush1.msra.mxu0 0.0
        %789 = vmatprep.subr.mxu0 0.0
        %790 = vmatpush1.msra.mxu0 0.0
        %791 = vmatprep.subr.mxu0 0.0
        %792 = vmatpush1.msra.mxu0 0.0
        %793 = vmatprep.subr.mxu0 0.0
        %794 = vmatpush1.msra.mxu0 0.0
        %795 = vmatprep.subr.mxu0 0.0
        %796 = vmatpush1.msra.mxu0 0.0
        %797 = vmatprep.subr.mxu0 0.0
        %798 = vmatpush1.msra.mxu0 %v431
        %799 = vmatprep.subr.mxu0 0.0
        %800 = vmatpush2.msra.mxu0 0.0
        %801 = vmatprep.subr.mxu0 0.0
        %802 = vmatpush2.msra.mxu0 0.0
        %803 = vmatprep.subr.mxu0 0.0
        %804 = vmatpush2.msra.mxu0 0.0
        %805 = vmatprep.subr.mxu0 0.0
        %806 = vmatpush2.msra.mxu0 0.0
        %807 = vmatprep.subr.mxu0 0.0
        %808 = vmatpush2.msra.mxu0 0.0
        %809 = vmatprep.subr.mxu0 0.0
        %810 = vmatpush2.msra.mxu0 0.0
        %811 = vmatprep.subr.mxu0 0.0
        %812 = vmatpush2.msra.mxu0 0.0
        %813 = vmatprep.subr.mxu0 0.0
        %814 = vmatpush2.msra.mxu0 0.0
        %815 = vmatprep.subr.mxu0 0.0
        %816 = vmatpush2.msra.mxu0 0.0
        %817 = vmatprep.subr.mxu0 0.0
        %818 = vmatpush2.msra.mxu0 0.0
        %819 = vmatprep.subr.mxu0 0.0
        %820 = vmatpush2.msra.mxu0 0.0
        %821 = vmatprep.subr.mxu0 0.0
        %822 = vmatpush2.msra.mxu0 0.0
        %823 = vmatprep.subr.mxu0 0.0
        %824 = vmatpush2.msra.mxu0 0.0
        %825 = vmatprep.subr.mxu0 0.0
        %826 = vmatpush2.msra.mxu0 0.0
        %827 = vmatprep.subr.mxu0 0.0
        %828 = vmatpush2.msra.mxu0 0.0
        %829 = vmatprep.subr.mxu0 0.0
        %830 = vmatpush2.msra.mxu0 0.0
        %831 = vmatprep.mubr.f32.mxu0 0.0
        %832 = vmatmul.mubr.f32.gmra.mxu0 %v765
        %v833 = vpop.f32.mrf.mxu0
        %v834 = vadd.f32 0.0, %v833
        %v835 = vpop.f32.mrf.mxu0
        %836 = vdwg.mxu0
        %v838 = vsel %vm437, %v596, 0
        %840 = vmatprep.subr.mxu0 0.0
        %841 = vmatpush1.msra.mxu0 0.0
        %842 = vmatprep.subr.mxu0 0.0
        %843 = vmatpush1.msra.mxu0 0.0
        %844 = vmatprep.subr.mxu0 0.0
        %845 = vmatpush1.msra.mxu0 0.0
        %846 = vmatprep.subr.mxu0 0.0
        %847 = vmatpush1.msra.mxu0 0.0
        %848 = vmatprep.subr.mxu0 0.0
        %849 = vmatpush1.msra.mxu0 0.0
        %850 = vmatprep.subr.mxu0 0.0
        %851 = vmatpush1.msra.mxu0 0.0
        %852 = vmatprep.subr.mxu0 0.0
        %853 = vmatpush1.msra.mxu0 0.0
        %854 = vmatprep.subr.mxu0 0.0
        %855 = vmatpush1.msra.mxu0 0.0
        %856 = vmatprep.subr.mxu0 0.0
        %857 = vmatpush1.msra.mxu0 0.0
        %858 = vmatprep.subr.mxu0 0.0
        %859 = vmatpush1.msra.mxu0 0.0
        %860 = vmatprep.subr.mxu0 0.0
        %861 = vmatpush1.msra.mxu0 0.0
        %862 = vmatprep.subr.mxu0 0.0
        %863 = vmatpush1.msra.mxu0 0.0
        %864 = vmatprep.subr.mxu0 0.0
        %865 = vmatpush1.msra.mxu0 0.0
        %866 = vmatprep.subr.mxu0 0.0
        %867 = vmatpush1.msra.mxu0 0.0
        %868 = vmatprep.subr.mxu0 0.0
        %869 = vmatpush1.msra.mxu0 0.0
        %870 = vmatprep.subr.mxu0 0.0
        %871 = vmatpush1.msra.mxu0 %v430
        %872 = vmatprep.subr.mxu0 0.0
        %873 = vmatpush2.msra.mxu0 0.0
        %874 = vmatprep.subr.mxu0 0.0
        %875 = vmatpush2.msra.mxu0 0.0
        %876 = vmatprep.subr.mxu0 0.0
        %877 = vmatpush2.msra.mxu0 0.0
        %878 = vmatprep.subr.mxu0 0.0
        %879 = vmatpush2.msra.mxu0 0.0
        %880 = vmatprep.subr.mxu0 0.0
        %881 = vmatpush2.msra.mxu0 0.0
        %882 = vmatprep.subr.mxu0 0.0
        %883 = vmatpush2.msra.mxu0 0.0
        %884 = vmatprep.subr.mxu0 0.0
        %885 = vmatpush2.msra.mxu0 0.0
        %886 = vmatprep.subr.mxu0 0.0
        %887 = vmatpush2.msra.mxu0 0.0
        %888 = vmatprep.subr.mxu0 0.0
        %889 = vmatpush2.msra.mxu0 0.0
        %890 = vmatprep.subr.mxu0 0.0
        %891 = vmatpush2.msra.mxu0 0.0
        %892 = vmatprep.subr.mxu0 0.0
        %893 = vmatpush2.msra.mxu0 0.0
        %894 = vmatprep.subr.mxu0 0.0
        %895 = vmatpush2.msra.mxu0 0.0
        %896 = vmatprep.subr.mxu0 0.0
        %897 = vmatpush2.msra.mxu0 0.0
        %898 = vmatprep.subr.mxu0 0.0
        %899 = vmatpush2.msra.mxu0 0.0
        %900 = vmatprep.subr.mxu0 0.0
        %901 = vmatpush2.msra.mxu0 0.0
        %902 = vmatprep.subr.mxu0 0.0
        %903 = vmatpush2.msra.mxu0 0.0
        %904 = vmatprep.mubr.f32.mxu0 0.0
        %905 = vmatmul.mubr.f32.gmra.mxu0 %v838
        %v906 = vpop.f32.mrf.mxu0
        %v907 = vadd.f32 %v834, %v906
        %v908 = vpop.f32.mrf.mxu0
        %909 = vdwg.mxu0
        %910 = vrot.lane.b32.xlu0 %v427, 112
        %v911 = vpop.permute.xlu0 %910
        %912 = vrot.lane.b32.xlu0 %v427, 80
        %v913 = vpop.permute.xlu0 %912
        %v914 = vsel %vm437, %v911, 0
        %v916 = vsel %vm437, %v913, 0
        %918 = vmatprep.subr.mxu0 0.0
        %919 = vmatpush1.xpose.msra.mxu0 0.0
        %920 = vmatprep.subr.mxu0 0.0
        %921 = vmatpush1.xpose.msra.mxu0 0.0
        %922 = vmatprep.subr.mxu0 0.0
        %923 = vmatpush1.xpose.msra.mxu0 0.0
        %924 = vmatprep.subr.mxu0 0.0
        %925 = vmatpush1.xpose.msra.mxu0 0.0
        %926 = vmatprep.subr.mxu0 0.0
        %927 = vmatpush1.xpose.msra.mxu0 0.0
        %928 = vmatprep.subr.mxu0 0.0
        %929 = vmatpush1.xpose.msra.mxu0 0.0
        %930 = vmatprep.subr.mxu0 0.0
        %931 = vmatpush1.xpose.msra.mxu0 0.0
        %932 = vmatprep.subr.mxu0 0.0
        %933 = vmatpush1.xpose.msra.mxu0 0.0
        %934 = vmatprep.subr.mxu0 0.0
        %935 = vmatpush1.xpose.msra.mxu0 0.0
        %936 = vmatprep.subr.mxu0 0.0
        %937 = vmatpush1.xpose.msra.mxu0 0.0
        %938 = vmatprep.subr.mxu0 0.0
        %939 = vmatpush1.xpose.msra.mxu0 0.0
        %940 = vmatprep.subr.mxu0 0.0
        %941 = vmatpush1.xpose.msra.mxu0 0.0
        %942 = vmatprep.subr.mxu0 0.0
        %943 = vmatpush1.xpose.msra.mxu0 0.0
        %944 = vmatprep.subr.mxu0 0.0
        %945 = vmatpush1.xpose.msra.mxu0 0.0
        %946 = vmatprep.subr.mxu0 0.0
        %947 = vmatpush1.xpose.msra.mxu0 0.0
        %948 = vmatprep.subr.mxu0 0.0
        %949 = vmatpush1.xpose.msra.mxu0 %v916
        %950 = vmatprep.subr.mxu0 0.0
        %951 = vmatpush2.xpose.msra.mxu0 0.0
        %952 = vmatprep.subr.mxu0 0.0
        %953 = vmatpush2.xpose.msra.mxu0 0.0
        %954 = vmatprep.subr.mxu0 0.0
        %955 = vmatpush2.xpose.msra.mxu0 0.0
        %956 = vmatprep.subr.mxu0 0.0
        %957 = vmatpush2.xpose.msra.mxu0 0.0
        %958 = vmatprep.subr.mxu0 0.0
        %959 = vmatpush2.xpose.msra.mxu0 0.0
        %960 = vmatprep.subr.mxu0 0.0
        %961 = vmatpush2.xpose.msra.mxu0 0.0
        %962 = vmatprep.subr.mxu0 0.0
        %963 = vmatpush2.xpose.msra.mxu0 0.0
        %964 = vmatprep.subr.mxu0 0.0
        %965 = vmatpush2.xpose.msra.mxu0 0.0
        %966 = vmatprep.subr.mxu0 0.0
        %967 = vmatpush2.xpose.msra.mxu0 0.0
        %968 = vmatprep.subr.mxu0 0.0
        %969 = vmatpush2.xpose.msra.mxu0 0.0
        %970 = vmatprep.subr.mxu0 0.0
        %971 = vmatpush2.xpose.msra.mxu0 0.0
        %972 = vmatprep.subr.mxu0 0.0
        %973 = vmatpush2.xpose.msra.mxu0 0.0
        %974 = vmatprep.subr.mxu0 0.0
        %975 = vmatpush2.xpose.msra.mxu0 0.0
        %976 = vmatprep.subr.mxu0 0.0
        %977 = vmatpush2.xpose.msra.mxu0 0.0
        %978 = vmatprep.subr.mxu0 0.0
        %979 = vmatpush2.xpose.msra.mxu0 0.0
        %980 = vmatprep.subr.mxu0 0.0
        %981 = vmatpush2.xpose.msra.mxu0 0.0
        %982 = vmatprep.mubr.f32.mxu0 0.0
        %983 = vmatmul.mubr.f32.gmra.mxu0 %v914
        %v984 = vpop.f32.mrf.mxu0
        %v985 = vadd.f32 %v343, %v984
        %v986 = vpop.f32.mrf.mxu0
        %987 = vdwg.mxu0
        %v988 = vsel %vm437, %v985, -inf
        %989 = vmax.xlane.f32.xlu0 %v988
        %v990 = vpop.xlane.xlu0 %989
        %v991 = vsub.f32 %v985, %v990
        %v992 = vmul.f32 %v991, 1.442695
        %v993 = vpow.pop %v992
        %v994 = vsel %vm437, %v993, 0.0
        %995 = vadd.xlane.f32.xlu0 %v994
        %v996 = vpop.xlane.xlu0 %995
        %v997 = vrcp.pop %v996
        %v998 = vmul.f32 %v993, %v997
        %999 = vrot.lane.b32.xlu0 %v427, 48
        %v1000 = vpop.permute.xlu0 %999
        %v1003 = vsel %vm437, %v998, 0
        %1005 = vmatprep.subr.mxu0 0.0
        %1006 = vmatpush1.msra.mxu0 0.0
        %1007 = vmatprep.subr.mxu0 0.0
        %1008 = vmatpush1.msra.mxu0 0.0
        %1009 = vmatprep.subr.mxu0 0.0
        %1010 = vmatpush1.msra.mxu0 0.0
        %1011 = vmatprep.subr.mxu0 0.0
        %1012 = vmatpush1.msra.mxu0 0.0
        %1013 = vmatprep.subr.mxu0 0.0
        %1014 = vmatpush1.msra.mxu0 0.0
        %1015 = vmatprep.subr.mxu0 0.0
        %1016 = vmatpush1.msra.mxu0 0.0
        %1017 = vmatprep.subr.mxu0 0.0
        %1018 = vmatpush1.msra.mxu0 0.0
        %1019 = vmatprep.subr.mxu0 0.0
        %1020 = vmatpush1.msra.mxu0 0.0
        %1021 = vmatprep.subr.mxu0 0.0
        %1022 = vmatpush1.msra.mxu0 0.0
        %1023 = vmatprep.subr.mxu0 0.0
        %1024 = vmatpush1.msra.mxu0 0.0
        %1025 = vmatprep.subr.mxu0 0.0
        %1026 = vmatpush1.msra.mxu0 0.0
        %1027 = vmatprep.subr.mxu0 0.0
        %1028 = vmatpush1.msra.mxu0 0.0
        %1029 = vmatprep.subr.mxu0 0.0
        %1030 = vmatpush1.msra.mxu0 0.0
        %1031 = vmatprep.subr.mxu0 0.0
        %1032 = vmatpush1.msra.mxu0 0.0
        %1033 = vmatprep.subr.mxu0 0.0
        %1034 = vmatpush1.msra.mxu0 0.0
        %1035 = vmatprep.subr.mxu0 0.0
        %1036 = vmatpush1.msra.mxu0 %v1000
        %1037 = vmatprep.subr.mxu0 0.0
        %1038 = vmatpush2.msra.mxu0 0.0
        %1039 = vmatprep.subr.mxu0 0.0
        %1040 = vmatpush2.msra.mxu0 0.0
        %1041 = vmatprep.subr.mxu0 0.0
        %1042 = vmatpush2.msra.mxu0 0.0
        %1043 = vmatprep.subr.mxu0 0.0
        %1044 = vmatpush2.msra.mxu0 0.0
        %1045 = vmatprep.subr.mxu0 0.0
        %1046 = vmatpush2.msra.mxu0 0.0
        %1047 = vmatprep.subr.mxu0 0.0
        %1048 = vmatpush2.msra.mxu0 0.0
        %1049 = vmatprep.subr.mxu0 0.0
        %1050 = vmatpush2.msra.mxu0 0.0
        %1051 = vmatprep.subr.mxu0 0.0
        %1052 = vmatpush2.msra.mxu0 0.0
        %1053 = vmatprep.subr.mxu0 0.0
        %1054 = vmatpush2.msra.mxu0 0.0
        %1055 = vmatprep.subr.mxu0 0.0
        %1056 = vmatpush2.msra.mxu0 0.0
        %1057 = vmatprep.subr.mxu0 0.0
        %1058 = vmatpush2.msra.mxu0 0.0
        %1059 = vmatprep.subr.mxu0 0.0
        %1060 = vmatpush2.msra.mxu0 0.0
        %1061 = vmatprep.subr.mxu0 0.0
        %1062 = vmatpush2.msra.mxu0 0.0
        %1063 = vmatprep.subr.mxu0 0.0
        %1064 = vmatpush2.msra.mxu0 0.0
        %1065 = vmatprep.subr.mxu0 0.0
        %1066 = vmatpush2.msra.mxu0 0.0
        %1067 = vmatprep.subr.mxu0 0.0
        %1068 = vmatpush2.msra.mxu0 0.0
        %1069 = vmatprep.mubr.f32.mxu0 0.0
        %1070 = vmatmul.mubr.f32.gmra.mxu0 %v1003
        %v1071 = vpop.f32.mrf.mxu0
        %v1072 = vadd.f32 0.0, %v1071
        %v1073 = vpop.f32.mrf.mxu0
        %1074 = vdwg.mxu0
        %v1076 = vsel %vm437, %v1072, 0
        %1078 = vmatprep.subr.mxu0 0.0
        %1079 = vmatpush1.msra.mxu0 0.0
        %1080 = vmatprep.subr.mxu0 0.0
        %1081 = vmatpush1.msra.mxu0 0.0
        %1082 = vmatprep.subr.mxu0 0.0
        %1083 = vmatpush1.msra.mxu0 0.0
        %1084 = vmatprep.subr.mxu0 0.0
        %1085 = vmatpush1.msra.mxu0 0.0
        %1086 = vmatprep.subr.mxu0 0.0
        %1087 = vmatpush1.msra.mxu0 0.0
        %1088 = vmatprep.subr.mxu0 0.0
        %1089 = vmatpush1.msra.mxu0 0.0
        %1090 = vmatprep.subr.mxu0 0.0
        %1091 = vmatpush1.msra.mxu0 0.0
        %1092 = vmatprep.subr.mxu0 0.0
        %1093 = vmatpush1.msra.mxu0 0.0
        %1094 = vmatprep.subr.mxu0 0.0
        %1095 = vmatpush1.msra.mxu0 0.0
        %1096 = vmatprep.subr.mxu0 0.0
        %1097 = vmatpush1.msra.mxu0 0.0
        %1098 = vmatprep.subr.mxu0 0.0
        %1099 = vmatpush1.msra.mxu0 0.0
        %1100 = vmatprep.subr.mxu0 0.0
        %1101 = vmatpush1.msra.mxu0 0.0
        %1102 = vmatprep.subr.mxu0 0.0
        %1103 = vmatpush1.msra.mxu0 0.0
        %1104 = vmatprep.subr.mxu0 0.0
        %1105 = vmatpush1.msra.mxu0 0.0
        %1106 = vmatprep.subr.mxu0 0.0
        %1107 = vmatpush1.msra.mxu0 0.0
        %1108 = vmatprep.subr.mxu0 0.0
        %1109 = vmatpush1.msra.mxu0 %v432
        %1110 = vmatprep.subr.mxu0 0.0
        %1111 = vmatpush2.msra.mxu0 0.0
        %1112 = vmatprep.subr.mxu0 0.0
        %1113 = vmatpush2.msra.mxu0 0.0
        %1114 = vmatprep.subr.mxu0 0.0
        %1115 = vmatpush2.msra.mxu0 0.0
        %1116 = vmatprep.subr.mxu0 0.0
        %1117 = vmatpush2.msra.mxu0 0.0
        %1118 = vmatprep.subr.mxu0 0.0
        %1119 = vmatpush2.msra.mxu0 0.0
        %1120 = vmatprep.subr.mxu0 0.0
        %1121 = vmatpush2.msra.mxu0 0.0
        %1122 = vmatprep.subr.mxu0 0.0
        %1123 = vmatpush2.msra.mxu0 0.0
        %1124 = vmatprep.subr.mxu0 0.0
        %1125 = vmatpush2.msra.mxu0 0.0
        %1126 = vmatprep.subr.mxu0 0.0
        %1127 = vmatpush2.msra.mxu0 0.0
        %1128 = vmatprep.subr.mxu0 0.0
        %1129 = vmatpush2.msra.mxu0 0.0
        %1130 = vmatprep.subr.mxu0 0.0
        %1131 = vmatpush2.msra.mxu0 0.0
        %1132 = vmatprep.subr.mxu0 0.0
        %1133 = vmatpush2.msra.mxu0 0.0
        %1134 = vmatprep.subr.mxu0 0.0
        %1135 = vmatpush2.msra.mxu0 0.0
        %1136 = vmatprep.subr.mxu0 0.0
        %1137 = vmatpush2.msra.mxu0 0.0
        %1138 = vmatprep.subr.mxu0 0.0
        %1139 = vmatpush2.msra.mxu0 0.0
        %1140 = vmatprep.subr.mxu0 0.0
        %1141 = vmatpush2.msra.mxu0 0.0
        %1142 = vmatprep.mubr.f32.mxu0 0.0
        %1143 = vmatmul.mubr.f32.gmra.mxu0 %v1076
        %v1144 = vpop.f32.mrf.mxu0
        %v1145 = vadd.f32 0.0, %v1144
        %v1146 = vpop.f32.mrf.mxu0
        %1147 = vdwg.mxu0
        %v1148 = vadd.f32 %v907, %v1145
        %1149 = vrot.lane.b32.xlu0 %v427, 104
        %v1150 = vpop.permute.xlu0 %1149
        %1151 = vrot.lane.b32.xlu0 %v427, 72
        %v1152 = vpop.permute.xlu0 %1151
        %v1153 = vsel %vm437, %v1150, 0
        %v1155 = vsel %vm437, %v1152, 0
        %1157 = vmatprep.subr.mxu0 0.0
        %1158 = vmatpush1.xpose.msra.mxu0 0.0
        %1159 = vmatprep.subr.mxu0 0.0
        %1160 = vmatpush1.xpose.msra.mxu0 0.0
        %1161 = vmatprep.subr.mxu0 0.0
        %1162 = vmatpush1.xpose.msra.mxu0 0.0
        %1163 = vmatprep.subr.mxu0 0.0
        %1164 = vmatpush1.xpose.msra.mxu0 0.0
        %1165 = vmatprep.subr.mxu0 0.0
        %1166 = vmatpush1.xpose.msra.mxu0 0.0
        %1167 = vmatprep.subr.mxu0 0.0
        %1168 = vmatpush1.xpose.msra.mxu0 0.0
        %1169 = vmatprep.subr.mxu0 0.0
        %1170 = vmatpush1.xpose.msra.mxu0 0.0
        %1171 = vmatprep.subr.mxu0 0.0
        %1172 = vmatpush1.xpose.msra.mxu0 0.0
        %1173 = vmatprep.subr.mxu0 0.0
        %1174 = vmatpush1.xpose.msra.mxu0 0.0
        %1175 = vmatprep.subr.mxu0 0.0
        %1176 = vmatpush1.xpose.msra.mxu0 0.0
        %1177 = vmatprep.subr.mxu0 0.0
        %1178 = vmatpush1.xpose.msra.mxu0 0.0
        %1179 = vmatprep.subr.mxu0 0.0
        %1180 = vmatpush1.xpose.msra.mxu0 0.0
        %1181 = vmatprep.subr.mxu0 0.0
        %1182 = vmatpush1.xpose.msra.mxu0 0.0
        %1183 = vmatprep.subr.mxu0 0.0
        %1184 = vmatpush1.xpose.msra.mxu0 0.0
        %1185 = vmatprep.subr.mxu0 0.0
        %1186 = vmatpush1.xpose.msra.mxu0 0.0
        %1187 = vmatprep.subr.mxu0 0.0
        %1188 = vmatpush1.xpose.msra.mxu0 %v1155
        %1189 = vmatprep.subr.mxu0 0.0
        %1190 = vmatpush2.xpose.msra.mxu0 0.0
        %1191 = vmatprep.subr.mxu0 0.0
        %1192 = vmatpush2.xpose.msra.mxu0 0.0
        %1193 = vmatprep.subr.mxu0 0.0
        %1194 = vmatpush2.xpose.msra.mxu0 0.0
        %1195 = vmatprep.subr.mxu0 0.0
        %1196 = vmatpush2.xpose.msra.mxu0 0.0
        %1197 = vmatprep.subr.mxu0 0.0
        %1198 = vmatpush2.xpose.msra.mxu0 0.0
        %1199 = vmatprep.subr.mxu0 0.0
        %1200 = vmatpush2.xpose.msra.mxu0 0.0
        %1201 = vmatprep.subr.mxu0 0.0
        %1202 = vmatpush2.xpose.msra.mxu0 0.0
        %1203 = vmatprep.subr.mxu0 0.0
        %1204 = vmatpush2.xpose.msra.mxu0 0.0
        %1205 = vmatprep.subr.mxu0 0.0
        %1206 = vmatpush2.xpose.msra.mxu0 0.0
        %1207 = vmatprep.subr.mxu0 0.0
        %1208 = vmatpush2.xpose.msra.mxu0 0.0
        %1209 = vmatprep.subr.mxu0 0.0
        %1210 = vmatpush2.xpose.msra.mxu0 0.0
        %1211 = vmatprep.subr.mxu0 0.0
        %1212 = vmatpush2.xpose.msra.mxu0 0.0
        %1213 = vmatprep.subr.mxu0 0.0
        %1214 = vmatpush2.xpose.msra.mxu0 0.0
        %1215 = vmatprep.subr.mxu0 0.0
        %1216 = vmatpush2.xpose.msra.mxu0 0.0
        %1217 = vmatprep.subr.mxu0 0.0
        %1218 = vmatpush2.xpose.msra.mxu0 0.0
        %1219 = vmatprep.subr.mxu0 0.0
        %1220 = vmatpush2.xpose.msra.mxu0 0.0
        %1221 = vmatprep.mubr.f32.mxu0 0.0
        %1222 = vmatmul.mubr.f32.gmra.mxu0 %v1153
        %v1223 = vpop.f32.mrf.mxu0
        %v1224 = vadd.f32 %v343, %v1223
        %v1225 = vpop.f32.mrf.mxu0
        %1226 = vdwg.mxu0
        %v1227 = vsel %vm437, %v1224, -inf
        %1228 = vmax.xlane.f32.xlu0 %v1227
        %v1229 = vpop.xlane.xlu0 %1228
        %v1230 = vsub.f32 %v1224, %v1229
        %v1231 = vmul.f32 %v1230, 1.442695
        %v1232 = vpow.pop %v1231
        %v1233 = vsel %vm437, %v1232, 0.0
        %1234 = vadd.xlane.f32.xlu0 %v1233
        %v1235 = vpop.xlane.xlu0 %1234
        %v1236 = vrcp.pop %v1235
        %v1237 = vmul.f32 %v1232, %v1236
        %1238 = vrot.lane.b32.xlu0 %v427, 40
        %v1239 = vpop.permute.xlu0 %1238
        %v1242 = vsel %vm437, %v1237, 0
        %1244 = vmatprep.subr.mxu0 0.0
        %1245 = vmatpush1.msra.mxu0 0.0
        %1246 = vmatprep.subr.mxu0 0.0
        %1247 = vmatpush1.msra.mxu0 0.0
        %1248 = vmatprep.subr.mxu0 0.0
        %1249 = vmatpush1.msra.mxu0 0.0
        %1250 = vmatprep.subr.mxu0 0.0
        %1251 = vmatpush1.msra.mxu0 0.0
        %1252 = vmatprep.subr.mxu0 0.0
        %1253 = vmatpush1.msra.mxu0 0.0
        %1254 = vmatprep.subr.mxu0 0.0
        %1255 = vmatpush1.msra.mxu0 0.0
        %1256 = vmatprep.subr.mxu0 0.0
        %1257 = vmatpush1.msra.mxu0 0.0
        %1258 = vmatprep.subr.mxu0 0.0
        %1259 = vmatpush1.msra.mxu0 0.0
        %1260 = vmatprep.subr.mxu0 0.0
        %1261 = vmatpush1.msra.mxu0 0.0
        %1262 = vmatprep.subr.mxu0 0.0
        %1263 = vmatpush1.msra.mxu0 0.0
        %1264 = vmatprep.subr.mxu0 0.0
        %1265 = vmatpush1.msra.mxu0 0.0
        %1266 = vmatprep.subr.mxu0 0.0
        %1267 = vmatpush1.msra.mxu0 0.0
        %1268 = vmatprep.subr.mxu0 0.0
        %1269 = vmatpush1.msra.mxu0 0.0
        %1270 = vmatprep.subr.mxu0 0.0
        %1271 = vmatpush1.msra.mxu0 0.0
        %1272 = vmatprep.subr.mxu0 0.0
        %1273 = vmatpush1.msra.mxu0 0.0
        %1274 = vmatprep.subr.mxu0 0.0
        %1275 = vmatpush1.msra.mxu0 %v1239
        %1276 = vmatprep.subr.mxu0 0.0
        %1277 = vmatpush2.msra.mxu0 0.0
        %1278 = vmatprep.subr.mxu0 0.0
        %1279 = vmatpush2.msra.mxu0 0.0
        %1280 = vmatprep.subr.mxu0 0.0
        %1281 = vmatpush2.msra.mxu0 0.0
        %1282 = vmatprep.subr.mxu0 0.0
        %1283 = vmatpush2.msra.mxu0 0.0
        %1284 = vmatprep.subr.mxu0 0.0
        %1285 = vmatpush2.msra.mxu0 0.0
        %1286 = vmatprep.subr.mxu0 0.0
        %1287 = vmatpush2.msra.mxu0 0.0
        %1288 = vmatprep.subr.mxu0 0.0
        %1289 = vmatpush2.msra.mxu0 0.0
        %1290 = vmatprep.subr.mxu0 0.0
        %1291 = vmatpush2.msra.mxu0 0.0
        %1292 = vmatprep.subr.mxu0 0.0
        %1293 = vmatpush2.msra.mxu0 0.0
        %1294 = vmatprep.subr.mxu0 0.0
        %1295 = vmatpush2.msra.mxu0 0.0
        %1296 = vmatprep.subr.mxu0 0.0
        %1297 = vmatpush2.msra.mxu0 0.0
        %1298 = vmatprep.subr.mxu0 0.0
        %1299 = vmatpush2.msra.mxu0 0.0
        %1300 = vmatprep.subr.mxu0 0.0
        %1301 = vmatpush2.msra.mxu0 0.0
        %1302 = vmatprep.subr.mxu0 0.0
        %1303 = vmatpush2.msra.mxu0 0.0
        %1304 = vmatprep.subr.mxu0 0.0
        %1305 = vmatpush2.msra.mxu0 0.0
        %1306 = vmatprep.subr.mxu0 0.0
        %1307 = vmatpush2.msra.mxu0 0.0
        %1308 = vmatprep.mubr.f32.mxu0 0.0
        %1309 = vmatmul.mubr.f32.gmra.mxu0 %v1242
        %v1310 = vpop.f32.mrf.mxu0
        %v1311 = vadd.f32 0.0, %v1310
        %v1312 = vpop.f32.mrf.mxu0
        %1313 = vdwg.mxu0
        %v1315 = vsel %vm437, %v1311, 0
        %1317 = vmatprep.subr.mxu0 0.0
        %1318 = vmatpush1.msra.mxu0 0.0
        %1319 = vmatprep.subr.mxu0 0.0
        %1320 = vmatpush1.msra.mxu0 0.0
        %1321 = vmatprep.subr.mxu0 0.0
        %1322 = vmatpush1.msra.mxu0 0.0
        %1323 = vmatprep.subr.mxu0 0.0
        %1324 = vmatpush1.msra.mxu0 0.0
        %1325 = vmatprep.subr.mxu0 0.0
        %1326 = vmatpush1.msra.mxu0 0.0
        %1327 = vmatprep.subr.mxu0 0.0
        %1328 = vmatpush1.msra.mxu0 0.0
        %1329 = vmatprep.subr.mxu0 0.0
        %1330 = vmatpush1.msra.mxu0 0.0
        %1331 = vmatprep.subr.mxu0 0.0
        %1332 = vmatpush1.msra.mxu0 0.0
        %1333 = vmatprep.subr.mxu0 0.0
        %1334 = vmatpush1.msra.mxu0 0.0
        %1335 = vmatprep.subr.mxu0 0.0
        %1336 = vmatpush1.msra.mxu0 0.0
        %1337 = vmatprep.subr.mxu0 0.0
        %1338 = vmatpush1.msra.mxu0 0.0
        %1339 = vmatprep.subr.mxu0 0.0
        %1340 = vmatpush1.msra.mxu0 0.0
        %1341 = vmatprep.subr.mxu0 0.0
        %1342 = vmatpush1.msra.mxu0 0.0
        %1343 = vmatprep.subr.mxu0 0.0
        %1344 = vmatpush1.msra.mxu0 0.0
        %1345 = vmatprep.subr.mxu0 0.0
        %1346 = vmatpush1.msra.mxu0 0.0
        %1347 = vmatprep.subr.mxu0 0.0
        %1348 = vmatpush1.msra.mxu0 %v433
        %1349 = vmatprep.subr.mxu0 0.0
        %1350 = vmatpush2.msra.mxu0 0.0
        %1351 = vmatprep.subr.mxu0 0.0
        %1352 = vmatpush2.msra.mxu0 0.0
        %1353 = vmatprep.subr.mxu0 0.0
        %1354 = vmatpush2.msra.mxu0 0.0
        %1355 = vmatprep.subr.mxu0 0.0
        %1356 = vmatpush2.msra.mxu0 0.0
        %1357 = vmatprep.subr.mxu0 0.0
        %1358 = vmatpush2.msra.mxu0 0.0
        %1359 = vmatprep.subr.mxu0 0.0
        %1360 = vmatpush2.msra.mxu0 0.0
        %1361 = vmatprep.subr.mxu0 0.0
        %1362 = vmatpush2.msra.mxu0 0.0
        %1363 = vmatprep.subr.mxu0 0.0
        %1364 = vmatpush2.msra.mxu0 0.0
        %1365 = vmatprep.subr.mxu0 0.0
        %1366 = vmatpush2.msra.mxu0 0.0
        %1367 = vmatprep.subr.mxu0 0.0
        %1368 = vmatpush2.msra.mxu0 0.0
        %1369 = vmatprep.subr.mxu0 0.0
        %1370 = vmatpush2.msra.mxu0 0.0
        %1371 = vmatprep.subr.mxu0 0.0
        %1372 = vmatpush2.msra.mxu0 0.0
        %1373 = vmatprep.subr.mxu0 0.0
        %1374 = vmatpush2.msra.mxu0 0.0
        %1375 = vmatprep.subr.mxu0 0.0
        %1376 = vmatpush2.msra.mxu0 0.0
        %1377 = vmatprep.subr.mxu0 0.0
        %1378 = vmatpush2.msra.mxu0 0.0
        %1379 = vmatprep.subr.mxu0 0.0
        %1380 = vmatpush2.msra.mxu0 0.0
        %1381 = vmatprep.mubr.f32.mxu0 0.0
        %1382 = vmatmul.mubr.f32.gmra.mxu0 %v1315
        %v1383 = vpop.f32.mrf.mxu0
        %v1384 = vadd.f32 0.0, %v1383
        %v1385 = vpop.f32.mrf.mxu0
        %1386 = vdwg.mxu0
        %v1387 = vadd.f32 %v1148, %v1384
        %v1388 = vld [vmem:[%s5] sm:$0x1]
        %v1390 = vlaneseq
        %v1391 = vshrl.u32 %v1390, 7
        %v1392 = vsub.s32 0, %v1391
        %v1393 = vrot.slane %v1388, %v1392
        %v1395 = vadd.f32 %v1387, %v1393
        %s1396 = scalar_lea.vmem [#allocation2], 32
        %v1397 = vld [vmem:[%s1396] sm:$0xff]
        %v1398 = vld [vmem:[%s1396 + $0x8] sm:$0xff]
        %v1399 = vld [vmem:[%s1396 + $0x10] sm:$0xff]
        %v1400 = vld [vmem:[%s1396 + $0x18] sm:$0xff]
        %s1401 = scalar_lea.vmem %s3, 1
        %v1402 = vld [vmem:[%s1401] sm:$0x1]
        %v1404 = vlaneseq
        %v1405 = vshrl.u32 %v1404, 7
        %v1406 = vsub.s32 0, %v1405
        %v1407 = vrot.slane %v1402, %v1406
        %v1410 = vsel %vm356, %v1395, 0
        %1412 = vmatprep.subr.mxu0 0.0
        %1413 = vmatpush1.msra.mxu0 0.0
        %1414 = vmatprep.subr.mxu0 0.0
        %1415 = vmatpush1.msra.mxu0 0.0
        %1416 = vmatprep.subr.mxu0 0.0
        %1417 = vmatpush1.msra.mxu0 0.0
        %1418 = vmatprep.subr.mxu0 0.0
        %1419 = vmatpush1.msra.mxu0 0.0
        %1420 = vmatprep.subr.mxu0 0.0
        %1421 = vmatpush1.msra.mxu0 0.0
        %1422 = vmatprep.subr.mxu0 0.0
        %1423 = vmatpush1.msra.mxu0 0.0
        %1424 = vmatprep.subr.mxu0 0.0
        %1425 = vmatpush1.msra.mxu0 0.0
        %1426 = vmatprep.subr.mxu0 0.0
        %1427 = vmatpush1.msra.mxu0 0.0
        %1428 = vmatprep.subr.mxu0 0.0
        %1429 = vmatpush1.msra.mxu0 0.0
        %1430 = vmatprep.subr.mxu0 0.0
        %1431 = vmatpush1.msra.mxu0 0.0
        %1432 = vmatprep.subr.mxu0 0.0
        %1433 = vmatpush1.msra.mxu0 0.0
        %1434 = vmatprep.subr.mxu0 0.0
        %1435 = vmatpush1.msra.mxu0 0.0
        %1436 = vmatprep.subr.mxu0 0.0
        %1437 = vmatpush1.msra.mxu0 %v1400
        %1438 = vmatprep.subr.mxu0 0.0
        %1439 = vmatpush1.msra.mxu0 %v1399
        %1440 = vmatprep.subr.mxu0 0.0
        %1441 = vmatpush1.msra.mxu0 %v1398
        %1442 = vmatprep.subr.mxu0 0.0
        %1443 = vmatpush1.msra.mxu0 %v1397
        %1444 = vmatprep.subr.mxu0 0.0
        %1445 = vmatpush2.msra.mxu0 0.0
        %1446 = vmatprep.subr.mxu0 0.0
        %1447 = vmatpush2.msra.mxu0 0.0
        %1448 = vmatprep.subr.mxu0 0.0
        %1449 = vmatpush2.msra.mxu0 0.0
        %1450 = vmatprep.subr.mxu0 0.0
        %1451 = vmatpush2.msra.mxu0 0.0
        %1452 = vmatprep.subr.mxu0 0.0
        %1453 = vmatpush2.msra.mxu0 0.0
        %1454 = vmatprep.subr.mxu0 0.0
        %1455 = vmatpush2.msra.mxu0 0.0
        %1456 = vmatprep.subr.mxu0 0.0
        %1457 = vmatpush2.msra.mxu0 0.0
        %1458 = vmatprep.subr.mxu0 0.0
        %1459 = vmatpush2.msra.mxu0 0.0
        %1460 = vmatprep.subr.mxu0 0.0
        %1461 = vmatpush2.msra.mxu0 0.0
        %1462 = vmatprep.subr.mxu0 0.0
        %1463 = vmatpush2.msra.mxu0 0.0
        %1464 = vmatprep.subr.mxu0 0.0
        %1465 = vmatpush2.msra.mxu0 0.0
        %1466 = vmatprep.subr.mxu0 0.0
        %1467 = vmatpush2.msra.mxu0 0.0
        %1468 = vmatprep.subr.mxu0 0.0
        %1469 = vmatpush2.msra.mxu0 0.0
        %1470 = vmatprep.subr.mxu0 0.0
        %1471 = vmatpush2.msra.mxu0 0.0
        %1472 = vmatprep.subr.mxu0 0.0
        %1473 = vmatpush2.msra.mxu0 0.0
        %1474 = vmatprep.subr.mxu0 0.0
        %1475 = vmatpush2.msra.mxu0 0.0
        %1476 = vmatprep.mubr.f32.mxu0 0.0
        %1477 = vmatmul.mubr.f32.gmra.mxu0 %v1410
        %v1478 = vpop.f32.mrf.mxu0
        %v1479 = vadd.f32 %v1407, %v1478
        %v1480 = vpop.f32.mrf.mxu0
        %1481 = vdwg.mxu0
        %s1482 = scalar_lea.vmem [#allocation5], 32
        %v1483 = vld [vmem:[%s1482] sm:$0xff]
        %v1484 = vld [vmem:[%s1482 + $0x8] sm:$0xff]
        %v1485 = vld [vmem:[%s1482 + $0x10] sm:$0xff]
        %v1486 = vld [vmem:[%s1482 + $0x18] sm:$0xff]
        %1488 = vrot.lane.b32.xlu0 %v1479, 96
        %v1489 = vpop.permute.xlu0 %1488
        %v1490 = vsel %vm437, %v1479, 0
        %v1492 = vsel %vm437, %v1489, 0
        %1494 = vmatprep.subr.mxu0 0.0
        %1495 = vmatpush1.xpose.msra.mxu0 0.0
        %1496 = vmatprep.subr.mxu0 0.0
        %1497 = vmatpush1.xpose.msra.mxu0 0.0
        %1498 = vmatprep.subr.mxu0 0.0
        %1499 = vmatpush1.xpose.msra.mxu0 0.0
        %1500 = vmatprep.subr.mxu0 0.0
        %1501 = vmatpush1.xpose.msra.mxu0 0.0
        %1502 = vmatprep.subr.mxu0 0.0
        %1503 = vmatpush1.xpose.msra.mxu0 0.0
        %1504 = vmatprep.subr.mxu0 0.0
        %1505 = vmatpush1.xpose.msra.mxu0 0.0
        %1506 = vmatprep.subr.mxu0 0.0
        %1507 = vmatpush1.xpose.msra.mxu0 0.0
        %1508 = vmatprep.subr.mxu0 0.0
        %1509 = vmatpush1.xpose.msra.mxu0 0.0
        %1510 = vmatprep.subr.mxu0 0.0
        %1511 = vmatpush1.xpose.msra.mxu0 0.0
        %1512 = vmatprep.subr.mxu0 0.0
        %1513 = vmatpush1.xpose.msra.mxu0 0.0
        %1514 = vmatprep.subr.mxu0 0.0
        %1515 = vmatpush1.xpose.msra.mxu0 0.0
        %1516 = vmatprep.subr.mxu0 0.0
        %1517 = vmatpush1.xpose.msra.mxu0 0.0
        %1518 = vmatprep.subr.mxu0 0.0
        %1519 = vmatpush1.xpose.msra.mxu0 0.0
        %1520 = vmatprep.subr.mxu0 0.0
        %1521 = vmatpush1.xpose.msra.mxu0 0.0
        %1522 = vmatprep.subr.mxu0 0.0
        %1523 = vmatpush1.xpose.msra.mxu0 0.0
        %1524 = vmatprep.subr.mxu0 0.0
        %1525 = vmatpush1.xpose.msra.mxu0 %v1492
        %1526 = vmatprep.subr.mxu0 0.0
        %1527 = vmatpush2.xpose.msra.mxu0 0.0
        %1528 = vmatprep.subr.mxu0 0.0
        %1529 = vmatpush2.xpose.msra.mxu0 0.0
        %1530 = vmatprep.subr.mxu0 0.0
        %1531 = vmatpush2.xpose.msra.mxu0 0.0
        %1532 = vmatprep.subr.mxu0 0.0
        %1533 = vmatpush2.xpose.msra.mxu0 0.0
        %1534 = vmatprep.subr.mxu0 0.0
        %1535 = vmatpush2.xpose.msra.mxu0 0.0
        %1536 = vmatprep.subr.mxu0 0.0
        %1537 = vmatpush2.xpose.msra.mxu0 0.0
        %1538 = vmatprep.subr.mxu0 0.0
        %1539 = vmatpush2.xpose.msra.mxu0 0.0
        %1540 = vmatprep.subr.mxu0 0.0
        %1541 = vmatpush2.xpose.msra.mxu0 0.0
        %1542 = vmatprep.subr.mxu0 0.0
        %1543 = vmatpush2.xpose.msra.mxu0 0.0
        %1544 = vmatprep.subr.mxu0 0.0
        %1545 = vmatpush2.xpose.msra.mxu0 0.0
        %1546 = vmatprep.subr.mxu0 0.0
        %1547 = vmatpush2.xpose.msra.mxu0 0.0
        %1548 = vmatprep.subr.mxu0 0.0
        %1549 = vmatpush2.xpose.msra.mxu0 0.0
        %1550 = vmatprep.subr.mxu0 0.0
        %1551 = vmatpush2.xpose.msra.mxu0 0.0
        %1552 = vmatprep.subr.mxu0 0.0
        %1553 = vmatpush2.xpose.msra.mxu0 0.0
        %1554 = vmatprep.subr.mxu0 0.0
        %1555 = vmatpush2.xpose.msra.mxu0 0.0
        %1556 = vmatprep.subr.mxu0 0.0
        %1557 = vmatpush2.xpose.msra.mxu0 0.0
        %1558 = vmatprep.mubr.f32.mxu0 0.0
        %1559 = vmatmul.mubr.f32.gmra.mxu0 %v1490
        %v1560 = vpop.f32.mrf.mxu0
        %v1561 = vadd.f32 %v343, %v1560
        %v1562 = vpop.f32.mrf.mxu0
        %1563 = vdwg.mxu0
        %v1564 = vsel %vm437, %v1561, -inf
        %1565 = vmax.xlane.f32.xlu0 %v1564
        %v1566 = vpop.xlane.xlu0 %1565
        %v1567 = vsub.f32 %v1561, %v1566
        %v1568 = vmul.f32 %v1567, 1.442695
        %v1569 = vpow.pop %v1568
        %v1570 = vsel %vm437, %v1569, 0.0
        %1571 = vadd.xlane.f32.xlu0 %v1570
        %v1572 = vpop.xlane.xlu0 %1571
        %v1573 = vrcp.pop %v1572
        %v1574 = vmul.f32 %v1569, %v1573
        %1575 = vrot.lane.b32.xlu0 %v1479, 64
        %v1576 = vpop.permute.xlu0 %1575
        %v1579 = vsel %vm437, %v1574, 0
        %1581 = vmatprep.subr.mxu0 0.0
        %1582 = vmatpush1.msra.mxu0 0.0
        %1583 = vmatprep.subr.mxu0 0.0
        %1584 = vmatpush1.msra.mxu0 0.0
        %1585 = vmatprep.subr.mxu0 0.0
        %1586 = vmatpush1.msra.mxu0 0.0
        %1587 = vmatprep.subr.mxu0 0.0
        %1588 = vmatpush1.msra.mxu0 0.0
        %1589 = vmatprep.subr.mxu0 0.0
        %1590 = vmatpush1.msra.mxu0 0.0
        %1591 = vmatprep.subr.mxu0 0.0
        %1592 = vmatpush1.msra.mxu0 0.0
        %1593 = vmatprep.subr.mxu0 0.0
        %1594 = vmatpush1.msra.mxu0 0.0
        %1595 = vmatprep.subr.mxu0 0.0
        %1596 = vmatpush1.msra.mxu0 0.0
        %1597 = vmatprep.subr.mxu0 0.0
        %1598 = vmatpush1.msra.mxu0 0.0
        %1599 = vmatprep.subr.mxu0 0.0
        %1600 = vmatpush1.msra.mxu0 0.0
        %1601 = vmatprep.subr.mxu0 0.0
        %1602 = vmatpush1.msra.mxu0 0.0
        %1603 = vmatprep.subr.mxu0 0.0
        %1604 = vmatpush1.msra.mxu0 0.0
        %1605 = vmatprep.subr.mxu0 0.0
        %1606 = vmatpush1.msra.mxu0 0.0
        %1607 = vmatprep.subr.mxu0 0.0
        %1608 = vmatpush1.msra.mxu0 0.0
        %1609 = vmatprep.subr.mxu0 0.0
        %1610 = vmatpush1.msra.mxu0 0.0
        %1611 = vmatprep.subr.mxu0 0.0
        %1612 = vmatpush1.msra.mxu0 %v1576
        %1613 = vmatprep.subr.mxu0 0.0
        %1614 = vmatpush2.msra.mxu0 0.0
        %1615 = vmatprep.subr.mxu0 0.0
        %1616 = vmatpush2.msra.mxu0 0.0
        %1617 = vmatprep.subr.mxu0 0.0
        %1618 = vmatpush2.msra.mxu0 0.0
        %1619 = vmatprep.subr.mxu0 0.0
        %1620 = vmatpush2.msra.mxu0 0.0
        %1621 = vmatprep.subr.mxu0 0.0
        %1622 = vmatpush2.msra.mxu0 0.0
        %1623 = vmatprep.subr.mxu0 0.0
        %1624 = vmatpush2.msra.mxu0 0.0
        %1625 = vmatprep.subr.mxu0 0.0
        %1626 = vmatpush2.msra.mxu0 0.0
        %1627 = vmatprep.subr.mxu0 0.0
        %1628 = vmatpush2.msra.mxu0 0.0
        %1629 = vmatprep.subr.mxu0 0.0
        %1630 = vmatpush2.msra.mxu0 0.0
        %1631 = vmatprep.subr.mxu0 0.0
        %1632 = vmatpush2.msra.mxu0 0.0
        %1633 = vmatprep.subr.mxu0 0.0
        %1634 = vmatpush2.msra.mxu0 0.0
        %1635 = vmatprep.subr.mxu0 0.0
        %1636 = vmatpush2.msra.mxu0 0.0
        %1637 = vmatprep.subr.mxu0 0.0
        %1638 = vmatpush2.msra.mxu0 0.0
        %1639 = vmatprep.subr.mxu0 0.0
        %1640 = vmatpush2.msra.mxu0 0.0
        %1641 = vmatprep.subr.mxu0 0.0
        %1642 = vmatpush2.msra.mxu0 0.0
        %1643 = vmatprep.subr.mxu0 0.0
        %1644 = vmatpush2.msra.mxu0 0.0
        %1645 = vmatprep.mubr.f32.mxu0 0.0
        %1646 = vmatmul.mubr.f32.gmra.mxu0 %v1579
        %v1647 = vpop.f32.mrf.mxu0
        %v1648 = vadd.f32 0.0, %v1647
        %v1649 = vpop.f32.mrf.mxu0
        %1650 = vdwg.mxu0
        %1651 = vrot.lane.b32.xlu0 %v1479, 120
        %v1652 = vpop.permute.xlu0 %1651
        %1653 = vrot.lane.b32.xlu0 %v1479, 88
        %v1654 = vpop.permute.xlu0 %1653
        %v1655 = vsel %vm437, %v1652, 0
        %v1657 = vsel %vm437, %v1654, 0
        %1659 = vmatprep.subr.mxu0 0.0
        %1660 = vmatpush1.xpose.msra.mxu0 0.0
        %1661 = vmatprep.subr.mxu0 0.0
        %1662 = vmatpush1.xpose.msra.mxu0 0.0
        %1663 = vmatprep.subr.mxu0 0.0
        %1664 = vmatpush1.xpose.msra.mxu0 0.0
        %1665 = vmatprep.subr.mxu0 0.0
        %1666 = vmatpush1.xpose.msra.mxu0 0.0
        %1667 = vmatprep.subr.mxu0 0.0
        %1668 = vmatpush1.xpose.msra.mxu0 0.0
        %1669 = vmatprep.subr.mxu0 0.0
        %1670 = vmatpush1.xpose.msra.mxu0 0.0
        %1671 = vmatprep.subr.mxu0 0.0
        %1672 = vmatpush1.xpose.msra.mxu0 0.0
        %1673 = vmatprep.subr.mxu0 0.0
        %1674 = vmatpush1.xpose.msra.mxu0 0.0
        %1675 = vmatprep.subr.mxu0 0.0
        %1676 = vmatpush1.xpose.msra.mxu0 0.0
        %1677 = vmatprep.subr.mxu0 0.0
        %1678 = vmatpush1.xpose.msra.mxu0 0.0
        %1679 = vmatprep.subr.mxu0 0.0
        %1680 = vmatpush1.xpose.msra.mxu0 0.0
        %1681 = vmatprep.subr.mxu0 0.0
        %1682 = vmatpush1.xpose.msra.mxu0 0.0
        %1683 = vmatprep.subr.mxu0 0.0
        %1684 = vmatpush1.xpose.msra.mxu0 0.0
        %1685 = vmatprep.subr.mxu0 0.0
        %1686 = vmatpush1.xpose.msra.mxu0 0.0
        %1687 = vmatprep.subr.mxu0 0.0
        %1688 = vmatpush1.xpose.msra.mxu0 0.0
        %1689 = vmatprep.subr.mxu0 0.0
        %1690 = vmatpush1.xpose.msra.mxu0 %v1657
        %1691 = vmatprep.subr.mxu0 0.0
        %1692 = vmatpush2.xpose.msra.mxu0 0.0
        %1693 = vmatprep.subr.mxu0 0.0
        %1694 = vmatpush2.xpose.msra.mxu0 0.0
        %1695 = vmatprep.subr.mxu0 0.0
        %1696 = vmatpush2.xpose.msra.mxu0 0.0
        %1697 = vmatprep.subr.mxu0 0.0
        %1698 = vmatpush2.xpose.msra.mxu0 0.0
        %1699 = vmatprep.subr.mxu0 0.0
        %1700 = vmatpush2.xpose.msra.mxu0 0.0
        %1701 = vmatprep.subr.mxu0 0.0
        %1702 = vmatpush2.xpose.msra.mxu0 0.0
        %1703 = vmatprep.subr.mxu0 0.0
        %1704 = vmatpush2.xpose.msra.mxu0 0.0
        %1705 = vmatprep.subr.mxu0 0.0
        %1706 = vmatpush2.xpose.msra.mxu0 0.0
        %1707 = vmatprep.subr.mxu0 0.0
        %1708 = vmatpush2.xpose.msra.mxu0 0.0
        %1709 = vmatprep.subr.mxu0 0.0
        %1710 = vmatpush2.xpose.msra.mxu0 0.0
        %1711 = vmatprep.subr.mxu0 0.0
        %1712 = vmatpush2.xpose.msra.mxu0 0.0
        %1713 = vmatprep.subr.mxu0 0.0
        %1714 = vmatpush2.xpose.msra.mxu0 0.0
        %1715 = vmatprep.subr.mxu0 0.0
        %1716 = vmatpush2.xpose.msra.mxu0 0.0
        %1717 = vmatprep.subr.mxu0 0.0
        %1718 = vmatpush2.xpose.msra.mxu0 0.0
        %1719 = vmatprep.subr.mxu0 0.0
        %1720 = vmatpush2.xpose.msra.mxu0 0.0
        %1721 = vmatprep.subr.mxu0 0.0
        %1722 = vmatpush2.xpose.msra.mxu0 0.0
        %1723 = vmatprep.mubr.f32.mxu0 0.0
        %1724 = vmatmul.mubr.f32.gmra.mxu0 %v1655
        %v1725 = vpop.f32.mrf.mxu0
        %v1726 = vadd.f32 %v343, %v1725
        %v1727 = vpop.f32.mrf.mxu0
        %1728 = vdwg.mxu0
        %v1729 = vsel %vm437, %v1726, -inf
        %1730 = vmax.xlane.f32.xlu0 %v1729
        %v1731 = vpop.xlane.xlu0 %1730
        %v1732 = vsub.f32 %v1726, %v1731
        %v1733 = vmul.f32 %v1732, 1.442695
        %v1734 = vpow.pop %v1733
        %v1735 = vsel %vm437, %v1734, 0.0
        %1736 = vadd.xlane.f32.xlu0 %v1735
        %v1737 = vpop.xlane.xlu0 %1736
        %v1738 = vrcp.pop %v1737
        %v1739 = vmul.f32 %v1734, %v1738
        %1740 = vrot.lane.b32.xlu0 %v1479, 56
        %v1741 = vpop.permute.xlu0 %1740
        %v1744 = vsel %vm437, %v1739, 0
        %1746 = vmatprep.subr.mxu0 0.0
        %1747 = vmatpush1.msra.mxu0 0.0
        %1748 = vmatprep.subr.mxu0 0.0
        %1749 = vmatpush1.msra.mxu0 0.0
        %1750 = vmatprep.subr.mxu0 0.0
        %1751 = vmatpush1.msra.mxu0 0.0
        %1752 = vmatprep.subr.mxu0 0.0
        %1753 = vmatpush1.msra.mxu0 0.0
        %1754 = vmatprep.subr.mxu0 0.0
        %1755 = vmatpush1.msra.mxu0 0.0
        %1756 = vmatprep.subr.mxu0 0.0
        %1757 = vmatpush1.msra.mxu0 0.0
        %1758 = vmatprep.subr.mxu0 0.0
        %1759 = vmatpush1.msra.mxu0 0.0
        %1760 = vmatprep.subr.mxu0 0.0
        %1761 = vmatpush1.msra.mxu0 0.0
        %1762 = vmatprep.subr.mxu0 0.0
        %1763 = vmatpush1.msra.mxu0 0.0
        %1764 = vmatprep.subr.mxu0 0.0
        %1765 = vmatpush1.msra.mxu0 0.0
        %1766 = vmatprep.subr.mxu0 0.0
        %1767 = vmatpush1.msra.mxu0 0.0
        %1768 = vmatprep.subr.mxu0 0.0
        %1769 = vmatpush1.msra.mxu0 0.0
        %1770 = vmatprep.subr.mxu0 0.0
        %1771 = vmatpush1.msra.mxu0 0.0
        %1772 = vmatprep.subr.mxu0 0.0
        %1773 = vmatpush1.msra.mxu0 0.0
        %1774 = vmatprep.subr.mxu0 0.0
        %1775 = vmatpush1.msra.mxu0 0.0
        %1776 = vmatprep.subr.mxu0 0.0
        %1777 = vmatpush1.msra.mxu0 %v1741
        %1778 = vmatprep.subr.mxu0 0.0
        %1779 = vmatpush2.msra.mxu0 0.0
        %1780 = vmatprep.subr.mxu0 0.0
        %1781 = vmatpush2.msra.mxu0 0.0
        %1782 = vmatprep.subr.mxu0 0.0
        %1783 = vmatpush2.msra.mxu0 0.0
        %1784 = vmatprep.subr.mxu0 0.0
        %1785 = vmatpush2.msra.mxu0 0.0
        %1786 = vmatprep.subr.mxu0 0.0
        %1787 = vmatpush2.msra.mxu0 0.0
        %1788 = vmatprep.subr.mxu0 0.0
        %1789 = vmatpush2.msra.mxu0 0.0
        %1790 = vmatprep.subr.mxu0 0.0
        %1791 = vmatpush2.msra.mxu0 0.0
        %1792 = vmatprep.subr.mxu0 0.0
        %1793 = vmatpush2.msra.mxu0 0.0
        %1794 = vmatprep.subr.mxu0 0.0
        %1795 = vmatpush2.msra.mxu0 0.0
        %1796 = vmatprep.subr.mxu0 0.0
        %1797 = vmatpush2.msra.mxu0 0.0
        %1798 = vmatprep.subr.mxu0 0.0
        %1799 = vmatpush2.msra.mxu0 0.0
        %1800 = vmatprep.subr.mxu0 0.0
        %1801 = vmatpush2.msra.mxu0 0.0
        %1802 = vmatprep.subr.mxu0 0.0
        %1803 = vmatpush2.msra.mxu0 0.0
        %1804 = vmatprep.subr.mxu0 0.0
        %1805 = vmatpush2.msra.mxu0 0.0
        %1806 = vmatprep.subr.mxu0 0.0
        %1807 = vmatpush2.msra.mxu0 0.0
        %1808 = vmatprep.subr.mxu0 0.0
        %1809 = vmatpush2.msra.mxu0 0.0
        %1810 = vmatprep.mubr.f32.mxu0 0.0
        %1811 = vmatmul.mubr.f32.gmra.mxu0 %v1744
        %v1812 = vpop.f32.mrf.mxu0
        %v1813 = vadd.f32 0.0, %v1812
        %v1814 = vpop.f32.mrf.mxu0
        %1815 = vdwg.mxu0
        %v1817 = vsel %vm437, %v1813, 0
        %1819 = vmatprep.subr.mxu0 0.0
        %1820 = vmatpush1.msra.mxu0 0.0
        %1821 = vmatprep.subr.mxu0 0.0
        %1822 = vmatpush1.msra.mxu0 0.0
        %1823 = vmatprep.subr.mxu0 0.0
        %1824 = vmatpush1.msra.mxu0 0.0
        %1825 = vmatprep.subr.mxu0 0.0
        %1826 = vmatpush1.msra.mxu0 0.0
        %1827 = vmatprep.subr.mxu0 0.0
        %1828 = vmatpush1.msra.mxu0 0.0
        %1829 = vmatprep.subr.mxu0 0.0
        %1830 = vmatpush1.msra.mxu0 0.0
        %1831 = vmatprep.subr.mxu0 0.0
        %1832 = vmatpush1.msra.mxu0 0.0
        %1833 = vmatprep.subr.mxu0 0.0
        %1834 = vmatpush1.msra.mxu0 0.0
        %1835 = vmatprep.subr.mxu0 0.0
        %1836 = vmatpush1.msra.mxu0 0.0
        %1837 = vmatprep.subr.mxu0 0.0
        %1838 = vmatpush1.msra.mxu0 0.0
        %1839 = vmatprep.subr.mxu0 0.0
        %1840 = vmatpush1.msra.mxu0 0.0
        %1841 = vmatprep.subr.mxu0 0.0
        %1842 = vmatpush1.msra.mxu0 0.0
        %1843 = vmatprep.subr.mxu0 0.0
        %1844 = vmatpush1.msra.mxu0 0.0
        %1845 = vmatprep.subr.mxu0 0.0
        %1846 = vmatpush1.msra.mxu0 0.0
        %1847 = vmatprep.subr.mxu0 0.0
        %1848 = vmatpush1.msra.mxu0 0.0
        %1849 = vmatprep.subr.mxu0 0.0
        %1850 = vmatpush1.msra.mxu0 %v1484
        %1851 = vmatprep.subr.mxu0 0.0
        %1852 = vmatpush2.msra.mxu0 0.0
        %1853 = vmatprep.subr.mxu0 0.0
        %1854 = vmatpush2.msra.mxu0 0.0
        %1855 = vmatprep.subr.mxu0 0.0
        %1856 = vmatpush2.msra.mxu0 0.0
        %1857 = vmatprep.subr.mxu0 0.0
        %1858 = vmatpush2.msra.mxu0 0.0
        %1859 = vmatprep.subr.mxu0 0.0
        %1860 = vmatpush2.msra.mxu0 0.0
        %1861 = vmatprep.subr.mxu0 0.0
        %1862 = vmatpush2.msra.mxu0 0.0
        %1863 = vmatprep.subr.mxu0 0.0
        %1864 = vmatpush2.msra.mxu0 0.0
        %1865 = vmatprep.subr.mxu0 0.0
        %1866 = vmatpush2.msra.mxu0 0.0
        %1867 = vmatprep.subr.mxu0 0.0
        %1868 = vmatpush2.msra.mxu0 0.0
        %1869 = vmatprep.subr.mxu0 0.0
        %1870 = vmatpush2.msra.mxu0 0.0
        %1871 = vmatprep.subr.mxu0 0.0
        %1872 = vmatpush2.msra.mxu0 0.0
        %1873 = vmatprep.subr.mxu0 0.0
        %1874 = vmatpush2.msra.mxu0 0.0
        %1875 = vmatprep.subr.mxu0 0.0
        %1876 = vmatpush2.msra.mxu0 0.0
        %1877 = vmatprep.subr.mxu0 0.0
        %1878 = vmatpush2.msra.mxu0 0.0
        %1879 = vmatprep.subr.mxu0 0.0
        %1880 = vmatpush2.msra.mxu0 0.0
        %1881 = vmatprep.subr.mxu0 0.0
        %1882 = vmatpush2.msra.mxu0 0.0
        %1883 = vmatprep.mubr.f32.mxu0 0.0
        %1884 = vmatmul.mubr.f32.gmra.mxu0 %v1817
        %v1885 = vpop.f32.mrf.mxu0
        %v1886 = vadd.f32 0.0, %v1885
        %v1887 = vpop.f32.mrf.mxu0
        %1888 = vdwg.mxu0
        %v1890 = vsel %vm437, %v1648, 0
        %1892 = vmatprep.subr.mxu0 0.0
        %1893 = vmatpush1.msra.mxu0 0.0
        %1894 = vmatprep.subr.mxu0 0.0
        %1895 = vmatpush1.msra.mxu0 0.0
        %1896 = vmatprep.subr.mxu0 0.0
        %1897 = vmatpush1.msra.mxu0 0.0
        %1898 = vmatprep.subr.mxu0 0.0
        %1899 = vmatpush1.msra.mxu0 0.0
        %1900 = vmatprep.subr.mxu0 0.0
        %1901 = vmatpush1.msra.mxu0 0.0
        %1902 = vmatprep.subr.mxu0 0.0
        %1903 = vmatpush1.msra.mxu0 0.0
        %1904 = vmatprep.subr.mxu0 0.0
        %1905 = vmatpush1.msra.mxu0 0.0
        %1906 = vmatprep.subr.mxu0 0.0
        %1907 = vmatpush1.msra.mxu0 0.0
        %1908 = vmatprep.subr.mxu0 0.0
        %1909 = vmatpush1.msra.mxu0 0.0
        %1910 = vmatprep.subr.mxu0 0.0
        %1911 = vmatpush1.msra.mxu0 0.0
        %1912 = vmatprep.subr.mxu0 0.0
        %1913 = vmatpush1.msra.mxu0 0.0
        %1914 = vmatprep.subr.mxu0 0.0
        %1915 = vmatpush1.msra.mxu0 0.0
        %1916 = vmatprep.subr.mxu0 0.0
        %1917 = vmatpush1.msra.mxu0 0.0
        %1918 = vmatprep.subr.mxu0 0.0
        %1919 = vmatpush1.msra.mxu0 0.0
        %1920 = vmatprep.subr.mxu0 0.0
        %1921 = vmatpush1.msra.mxu0 0.0
        %1922 = vmatprep.subr.mxu0 0.0
        %1923 = vmatpush1.msra.mxu0 %v1483
        %1924 = vmatprep.subr.mxu0 0.0
        %1925 = vmatpush2.msra.mxu0 0.0
        %1926 = vmatprep.subr.mxu0 0.0
        %1927 = vmatpush2.msra.mxu0 0.0
        %1928 = vmatprep.subr.mxu0 0.0
        %1929 = vmatpush2.msra.mxu0 0.0
        %1930 = vmatprep.subr.mxu0 0.0
        %1931 = vmatpush2.msra.mxu0 0.0
        %1932 = vmatprep.subr.mxu0 0.0
        %1933 = vmatpush2.msra.mxu0 0.0
        %1934 = vmatprep.subr.mxu0 0.0
        %1935 = vmatpush2.msra.mxu0 0.0
        %1936 = vmatprep.subr.mxu0 0.0
        %1937 = vmatpush2.msra.mxu0 0.0
        %1938 = vmatprep.subr.mxu0 0.0
        %1939 = vmatpush2.msra.mxu0 0.0
        %1940 = vmatprep.subr.mxu0 0.0
        %1941 = vmatpush2.msra.mxu0 0.0
        %1942 = vmatprep.subr.mxu0 0.0
        %1943 = vmatpush2.msra.mxu0 0.0
        %1944 = vmatprep.subr.mxu0 0.0
        %1945 = vmatpush2.msra.mxu0 0.0
        %1946 = vmatprep.subr.mxu0 0.0
        %1947 = vmatpush2.msra.mxu0 0.0
        %1948 = vmatprep.subr.mxu0 0.0
        %1949 = vmatpush2.msra.mxu0 0.0
        %1950 = vmatprep.subr.mxu0 0.0
        %1951 = vmatpush2.msra.mxu0 0.0
        %1952 = vmatprep.subr.mxu0 0.0
        %1953 = vmatpush2.msra.mxu0 0.0
        %1954 = vmatprep.subr.mxu0 0.0
        %1955 = vmatpush2.msra.mxu0 0.0
        %1956 = vmatprep.mubr.f32.mxu0 0.0
        %1957 = vmatmul.mubr.f32.gmra.mxu0 %v1890
        %v1958 = vpop.f32.mrf.mxu0
        %v1959 = vadd.f32 %v1886, %v1958
        %v1960 = vpop.f32.mrf.mxu0
        %1961 = vdwg.mxu0
        %1962 = vrot.lane.b32.xlu0 %v1479, 112
        %v1963 = vpop.permute.xlu0 %1962
        %1964 = vrot.lane.b32.xlu0 %v1479, 80
        %v1965 = vpop.permute.xlu0 %1964
        %v1966 = vsel %vm437, %v1963, 0
        %v1968 = vsel %vm437, %v1965, 0
        %1970 = vmatprep.subr.mxu0 0.0
        %1971 = vmatpush1.xpose.msra.mxu0 0.0
        %1972 = vmatprep.subr.mxu0 0.0
        %1973 = vmatpush1.xpose.msra.mxu0 0.0
        %1974 = vmatprep.subr.mxu0 0.0
        %1975 = vmatpush1.xpose.msra.mxu0 0.0
        %1976 = vmatprep.subr.mxu0 0.0
        %1977 = vmatpush1.xpose.msra.mxu0 0.0
        %1978 = vmatprep.subr.mxu0 0.0
        %1979 = vmatpush1.xpose.msra.mxu0 0.0
        %1980 = vmatprep.subr.mxu0 0.0
        %1981 = vmatpush1.xpose.msra.mxu0 0.0
        %1982 = vmatprep.subr.mxu0 0.0
        %1983 = vmatpush1.xpose.msra.mxu0 0.0
        %1984 = vmatprep.subr.mxu0 0.0
        %1985 = vmatpush1.xpose.msra.mxu0 0.0
        %1986 = vmatprep.subr.mxu0 0.0
        %1987 = vmatpush1.xpose.msra.mxu0 0.0
        %1988 = vmatprep.subr.mxu0 0.0
        %1989 = vmatpush1.xpose.msra.mxu0 0.0
        %1990 = vmatprep.subr.mxu0 0.0
        %1991 = vmatpush1.xpose.msra.mxu0 0.0
        %1992 = vmatprep.subr.mxu0 0.0
        %1993 = vmatpush1.xpose.msra.mxu0 0.0
        %1994 = vmatprep.subr.mxu0 0.0
        %1995 = vmatpush1.xpose.msra.mxu0 0.0
        %1996 = vmatprep.subr.mxu0 0.0
        %1997 = vmatpush1.xpose.msra.mxu0 0.0
        %1998 = vmatprep.subr.mxu0 0.0
        %1999 = vmatpush1.xpose.msra.mxu0 0.0
        %2000 = vmatprep.subr.mxu0 0.0
        %2001 = vmatpush1.xpose.msra.mxu0 %v1968
        %2002 = vmatprep.subr.mxu0 0.0
        %2003 = vmatpush2.xpose.msra.mxu0 0.0
        %2004 = vmatprep.subr.mxu0 0.0
        %2005 = vmatpush2.xpose.msra.mxu0 0.0
        %2006 = vmatprep.subr.mxu0 0.0
        %2007 = vmatpush2.xpose.msra.mxu0 0.0
        %2008 = vmatprep.subr.mxu0 0.0
        %2009 = vmatpush2.xpose.msra.mxu0 0.0
        %2010 = vmatprep.subr.mxu0 0.0
        %2011 = vmatpush2.xpose.msra.mxu0 0.0
        %2012 = vmatprep.subr.mxu0 0.0
        %2013 = vmatpush2.xpose.msra.mxu0 0.0
        %2014 = vmatprep.subr.mxu0 0.0
        %2015 = vmatpush2.xpose.msra.mxu0 0.0
        %2016 = vmatprep.subr.mxu0 0.0
        %2017 = vmatpush2.xpose.msra.mxu0 0.0
        %2018 = vmatprep.subr.mxu0 0.0
        %2019 = vmatpush2.xpose.msra.mxu0 0.0
        %2020 = vmatprep.subr.mxu0 0.0
        %2021 = vmatpush2.xpose.msra.mxu0 0.0
        %2022 = vmatprep.subr.mxu0 0.0
        %2023 = vmatpush2.xpose.msra.mxu0 0.0
        %2024 = vmatprep.subr.mxu0 0.0
        %2025 = vmatpush2.xpose.msra.mxu0 0.0
        %2026 = vmatprep.subr.mxu0 0.0
        %2027 = vmatpush2.xpose.msra.mxu0 0.0
        %2028 = vmatprep.subr.mxu0 0.0
        %2029 = vmatpush2.xpose.msra.mxu0 0.0
        %2030 = vmatprep.subr.mxu0 0.0
        %2031 = vmatpush2.xpose.msra.mxu0 0.0
        %2032 = vmatprep.subr.mxu0 0.0
        %2033 = vmatpush2.xpose.msra.mxu0 0.0
        %2034 = vmatprep.mubr.f32.mxu0 0.0
        %2035 = vmatmul.mubr.f32.gmra.mxu0 %v1966
        %v2036 = vpop.f32.mrf.mxu0
        %v2037 = vadd.f32 %v343, %v2036
        %v2038 = vpop.f32.mrf.mxu0
        %2039 = vdwg.mxu0
        %v2040 = vsel %vm437, %v2037, -inf
        %2041 = vmax.xlane.f32.xlu0 %v2040
        %v2042 = vpop.xlane.xlu0 %2041
        %v2043 = vsub.f32 %v2037, %v2042
        %v2044 = vmul.f32 %v2043, 1.442695
        %v2045 = vpow.pop %v2044
        %v2046 = vsel %vm437, %v2045, 0.0
        %2047 = vadd.xlane.f32.xlu0 %v2046
        %v2048 = vpop.xlane.xlu0 %2047
        %v2049 = vrcp.pop %v2048
        %v2050 = vmul.f32 %v2045, %v2049
        %2051 = vrot.lane.b32.xlu0 %v1479, 48
        %v2052 = vpop.permute.xlu0 %2051
        %v2055 = vsel %vm437, %v2050, 0
        %2057 = vmatprep.subr.mxu0 0.0
        %2058 = vmatpush1.msra.mxu0 0.0
        %2059 = vmatprep.subr.mxu0 0.0
        %2060 = vmatpush1.msra.mxu0 0.0
        %2061 = vmatprep.subr.mxu0 0.0
        %2062 = vmatpush1.msra.mxu0 0.0
        %2063 = vmatprep.subr.mxu0 0.0
        %2064 = vmatpush1.msra.mxu0 0.0
        %2065 = vmatprep.subr.mxu0 0.0
        %2066 = vmatpush1.msra.mxu0 0.0
        %2067 = vmatprep.subr.mxu0 0.0
        %2068 = vmatpush1.msra.mxu0 0.0
        %2069 = vmatprep.subr.mxu0 0.0
        %2070 = vmatpush1.msra.mxu0 0.0
        %2071 = vmatprep.subr.mxu0 0.0
        %2072 = vmatpush1.msra.mxu0 0.0
        %2073 = vmatprep.subr.mxu0 0.0
        %2074 = vmatpush1.msra.mxu0 0.0
        %2075 = vmatprep.subr.mxu0 0.0
        %2076 = vmatpush1.msra.mxu0 0.0
        %2077 = vmatprep.subr.mxu0 0.0
        %2078 = vmatpush1.msra.mxu0 0.0
        %2079 = vmatprep.subr.mxu0 0.0
        %2080 = vmatpush1.msra.mxu0 0.0
        %2081 = vmatprep.subr.mxu0 0.0
        %2082 = vmatpush1.msra.mxu0 0.0
        %2083 = vmatprep.subr.mxu0 0.0
        %2084 = vmatpush1.msra.mxu0 0.0
        %2085 = vmatprep.subr.mxu0 0.0
        %2086 = vmatpush1.msra.mxu0 0.0
        %2087 = vmatprep.subr.mxu0 0.0
        %2088 = vmatpush1.msra.mxu0 %v2052
        %2089 = vmatprep.subr.mxu0 0.0
        %2090 = vmatpush2.msra.mxu0 0.0
        %2091 = vmatprep.subr.mxu0 0.0
        %2092 = vmatpush2.msra.mxu0 0.0
        %2093 = vmatprep.subr.mxu0 0.0
        %2094 = vmatpush2.msra.mxu0 0.0
        %2095 = vmatprep.subr.mxu0 0.0
        %2096 = vmatpush2.msra.mxu0 0.0
        %2097 = vmatprep.subr.mxu0 0.0
        %2098 = vmatpush2.msra.mxu0 0.0
        %2099 = vmatprep.subr.mxu0 0.0
        %2100 = vmatpush2.msra.mxu0 0.0
        %2101 = vmatprep.subr.mxu0 0.0
        %2102 = vmatpush2.msra.mxu0 0.0
        %2103 = vmatprep.subr.mxu0 0.0
        %2104 = vmatpush2.msra.mxu0 0.0
        %2105 = vmatprep.subr.mxu0 0.0
        %2106 = vmatpush2.msra.mxu0 0.0
        %2107 = vmatprep.subr.mxu0 0.0
        %2108 = vmatpush2.msra.mxu0 0.0
        %2109 = vmatprep.subr.mxu0 0.0
        %2110 = vmatpush2.msra.mxu0 0.0
        %2111 = vmatprep.subr.mxu0 0.0
        %2112 = vmatpush2.msra.mxu0 0.0
        %2113 = vmatprep.subr.mxu0 0.0
        %2114 = vmatpush2.msra.mxu0 0.0
        %2115 = vmatprep.subr.mxu0 0.0
        %2116 = vmatpush2.msra.mxu0 0.0
        %2117 = vmatprep.subr.mxu0 0.0
        %2118 = vmatpush2.msra.mxu0 0.0
        %2119 = vmatprep.subr.mxu0 0.0
        %2120 = vmatpush2.msra.mxu0 0.0
        %2121 = vmatprep.mubr.f32.mxu0 0.0
        %2122 = vmatmul.mubr.f32.gmra.mxu0 %v2055
        %v2123 = vpop.f32.mrf.mxu0
        %v2124 = vadd.f32 0.0, %v2123
        %v2125 = vpop.f32.mrf.mxu0
        %2126 = vdwg.mxu0
        %v2128 = vsel %vm437, %v2124, 0
        %2130 = vmatprep.subr.mxu0 0.0
        %2131 = vmatpush1.msra.mxu0 0.0
        %2132 = vmatprep.subr.mxu0 0.0
        %2133 = vmatpush1.msra.mxu0 0.0
        %2134 = vmatprep.subr.mxu0 0.0
        %2135 = vmatpush1.msra.mxu0 0.0
        %2136 = vmatprep.subr.mxu0 0.0
        %2137 = vmatpush1.msra.mxu0 0.0
        %2138 = vmatprep.subr.mxu0 0.0
        %2139 = vmatpush1.msra.mxu0 0.0
        %2140 = vmatprep.subr.mxu0 0.0
        %2141 = vmatpush1.msra.mxu0 0.0
        %2142 = vmatprep.subr.mxu0 0.0
        %2143 = vmatpush1.msra.mxu0 0.0
        %2144 = vmatprep.subr.mxu0 0.0
        %2145 = vmatpush1.msra.mxu0 0.0
        %2146 = vmatprep.subr.mxu0 0.0
        %2147 = vmatpush1.msra.mxu0 0.0
        %2148 = vmatprep.subr.mxu0 0.0
        %2149 = vmatpush1.msra.mxu0 0.0
        %2150 = vmatprep.subr.mxu0 0.0
        %2151 = vmatpush1.msra.mxu0 0.0
        %2152 = vmatprep.subr.mxu0 0.0
        %2153 = vmatpush1.msra.mxu0 0.0
        %2154 = vmatprep.subr.mxu0 0.0
        %2155 = vmatpush1.msra.mxu0 0.0
        %2156 = vmatprep.subr.mxu0 0.0
        %2157 = vmatpush1.msra.mxu0 0.0
        %2158 = vmatprep.subr.mxu0 0.0
        %2159 = vmatpush1.msra.mxu0 0.0
        %2160 = vmatprep.subr.mxu0 0.0
        %2161 = vmatpush1.msra.mxu0 %v1485
        %2162 = vmatprep.subr.mxu0 0.0
        %2163 = vmatpush2.msra.mxu0 0.0
        %2164 = vmatprep.subr.mxu0 0.0
        %2165 = vmatpush2.msra.mxu0 0.0
        %2166 = vmatprep.subr.mxu0 0.0
        %2167 = vmatpush2.msra.mxu0 0.0
        %2168 = vmatprep.subr.mxu0 0.0
        %2169 = vmatpush2.msra.mxu0 0.0
        %2170 = vmatprep.subr.mxu0 0.0
        %2171 = vmatpush2.msra.mxu0 0.0
        %2172 = vmatprep.subr.mxu0 0.0
        %2173 = vmatpush2.msra.mxu0 0.0
        %2174 = vmatprep.subr.mxu0 0.0
        %2175 = vmatpush2.msra.mxu0 0.0
        %2176 = vmatprep.subr.mxu0 0.0
        %2177 = vmatpush2.msra.mxu0 0.0
        %2178 = vmatprep.subr.mxu0 0.0
        %2179 = vmatpush2.msra.mxu0 0.0
        %2180 = vmatprep.subr.mxu0 0.0
        %2181 = vmatpush2.msra.mxu0 0.0
        %2182 = vmatprep.subr.mxu0 0.0
        %2183 = vmatpush2.msra.mxu0 0.0
        %2184 = vmatprep.subr.mxu0 0.0
        %2185 = vmatpush2.msra.mxu0 0.0
        %2186 = vmatprep.subr.mxu0 0.0
        %2187 = vmatpush2.msra.mxu0 0.0
        %2188 = vmatprep.subr.mxu0 0.0
        %2189 = vmatpush2.msra.mxu0 0.0
        %2190 = vmatprep.subr.mxu0 0.0
        %2191 = vmatpush2.msra.mxu0 0.0
        %2192 = vmatprep.subr.mxu0 0.0
        %2193 = vmatpush2.msra.mxu0 0.0
        %2194 = vmatprep.mubr.f32.mxu0 0.0
        %2195 = vmatmul.mubr.f32.gmra.mxu0 %v2128
        %v2196 = vpop.f32.mrf.mxu0
        %v2197 = vadd.f32 0.0, %v2196
        %v2198 = vpop.f32.mrf.mxu0
        %2199 = vdwg.mxu0
        %v2200 = vadd.f32 %v1959, %v2197
        %2201 = vrot.lane.b32.xlu0 %v1479, 104
        %v2202 = vpop.permute.xlu0 %2201
        %2203 = vrot.lane.b32.xlu0 %v1479, 72
        %v2204 = vpop.permute.xlu0 %2203
        %v2205 = vsel %vm437, %v2202, 0
        %v2207 = vsel %vm437, %v2204, 0
        %2209 = vmatprep.subr.mxu0 0.0
        %2210 = vmatpush1.xpose.msra.mxu0 0.0
        %2211 = vmatprep.subr.mxu0 0.0
        %2212 = vmatpush1.xpose.msra.mxu0 0.0
        %2213 = vmatprep.subr.mxu0 0.0
        %2214 = vmatpush1.xpose.msra.mxu0 0.0
        %2215 = vmatprep.subr.mxu0 0.0
        %2216 = vmatpush1.xpose.msra.mxu0 0.0
        %2217 = vmatprep.subr.mxu0 0.0
        %2218 = vmatpush1.xpose.msra.mxu0 0.0
        %2219 = vmatprep.subr.mxu0 0.0
        %2220 = vmatpush1.xpose.msra.mxu0 0.0
        %2221 = vmatprep.subr.mxu0 0.0
        %2222 = vmatpush1.xpose.msra.mxu0 0.0
        %2223 = vmatprep.subr.mxu0 0.0
        %2224 = vmatpush1.xpose.msra.mxu0 0.0
        %2225 = vmatprep.subr.mxu0 0.0
        %2226 = vmatpush1.xpose.msra.mxu0 0.0
        %2227 = vmatprep.subr.mxu0 0.0
        %2228 = vmatpush1.xpose.msra.mxu0 0.0
        %2229 = vmatprep.subr.mxu0 0.0
        %2230 = vmatpush1.xpose.msra.mxu0 0.0
        %2231 = vmatprep.subr.mxu0 0.0
        %2232 = vmatpush1.xpose.msra.mxu0 0.0
        %2233 = vmatprep.subr.mxu0 0.0
        %2234 = vmatpush1.xpose.msra.mxu0 0.0
        %2235 = vmatprep.subr.mxu0 0.0
        %2236 = vmatpush1.xpose.msra.mxu0 0.0
        %2237 = vmatprep.subr.mxu0 0.0
        %2238 = vmatpush1.xpose.msra.mxu0 0.0
        %2239 = vmatprep.subr.mxu0 0.0
        %2240 = vmatpush1.xpose.msra.mxu0 %v2207
        %2241 = vmatprep.subr.mxu0 0.0
        %2242 = vmatpush2.xpose.msra.mxu0 0.0
        %2243 = vmatprep.subr.mxu0 0.0
        %2244 = vmatpush2.xpose.msra.mxu0 0.0
        %2245 = vmatprep.subr.mxu0 0.0
        %2246 = vmatpush2.xpose.msra.mxu0 0.0
        %2247 = vmatprep.subr.mxu0 0.0
        %2248 = vmatpush2.xpose.msra.mxu0 0.0
        %2249 = vmatprep.subr.mxu0 0.0
        %2250 = vmatpush2.xpose.msra.mxu0 0.0
        %2251 = vmatprep.subr.mxu0 0.0
        %2252 = vmatpush2.xpose.msra.mxu0 0.0
        %2253 = vmatprep.subr.mxu0 0.0
        %2254 = vmatpush2.xpose.msra.mxu0 0.0
        %2255 = vmatprep.subr.mxu0 0.0
        %2256 = vmatpush2.xpose.msra.mxu0 0.0
        %2257 = vmatprep.subr.mxu0 0.0
        %2258 = vmatpush2.xpose.msra.mxu0 0.0
        %2259 = vmatprep.subr.mxu0 0.0
        %2260 = vmatpush2.xpose.msra.mxu0 0.0
        %2261 = vmatprep.subr.mxu0 0.0
        %2262 = vmatpush2.xpose.msra.mxu0 0.0
        %2263 = vmatprep.subr.mxu0 0.0
        %2264 = vmatpush2.xpose.msra.mxu0 0.0
        %2265 = vmatprep.subr.mxu0 0.0
        %2266 = vmatpush2.xpose.msra.mxu0 0.0
        %2267 = vmatprep.subr.mxu0 0.0
        %2268 = vmatpush2.xpose.msra.mxu0 0.0
        %2269 = vmatprep.subr.mxu0 0.0
        %2270 = vmatpush2.xpose.msra.mxu0 0.0
        %2271 = vmatprep.subr.mxu0 0.0
        %2272 = vmatpush2.xpose.msra.mxu0 0.0
        %2273 = vmatprep.mubr.f32.mxu0 0.0
        %2274 = vmatmul.mubr.f32.gmra.mxu0 %v2205
        %v2275 = vpop.f32.mrf.mxu0
        %v2276 = vadd.f32 %v343, %v2275
        %v2277 = vpop.f32.mrf.mxu0
        %2278 = vdwg.mxu0
        %v2279 = vsel %vm437, %v2276, -inf
        %2280 = vmax.xlane.f32.xlu0 %v2279
        %v2281 = vpop.xlane.xlu0 %2280
        %v2282 = vsub.f32 %v2276, %v2281
        %v2283 = vmul.f32 %v2282, 1.442695
        %v2284 = vpow.pop %v2283
        %v2285 = vsel %vm437, %v2284, 0.0
        %2286 = vadd.xlane.f32.xlu0 %v2285
        %v2287 = vpop.xlane.xlu0 %2286
        %v2288 = vrcp.pop %v2287
        %v2289 = vmul.f32 %v2284, %v2288
        %2290 = vrot.lane.b32.xlu0 %v1479, 40
        %v2291 = vpop.permute.xlu0 %2290
        %v2294 = vsel %vm437, %v2289, 0
        %2296 = vmatprep.subr.mxu0 0.0
        %2297 = vmatpush1.msra.mxu0 0.0
        %2298 = vmatprep.subr.mxu0 0.0
        %2299 = vmatpush1.msra.mxu0 0.0
        %2300 = vmatprep.subr.mxu0 0.0
        %2301 = vmatpush1.msra.mxu0 0.0
        %2302 = vmatprep.subr.mxu0 0.0
        %2303 = vmatpush1.msra.mxu0 0.0
        %2304 = vmatprep.subr.mxu0 0.0
        %2305 = vmatpush1.msra.mxu0 0.0
        %2306 = vmatprep.subr.mxu0 0.0
        %2307 = vmatpush1.msra.mxu0 0.0
        %2308 = vmatprep.subr.mxu0 0.0
        %2309 = vmatpush1.msra.mxu0 0.0
        %2310 = vmatprep.subr.mxu0 0.0
        %2311 = vmatpush1.msra.mxu0 0.0
        %2312 = vmatprep.subr.mxu0 0.0
        %2313 = vmatpush1.msra.mxu0 0.0
        %2314 = vmatprep.subr.mxu0 0.0
        %2315 = vmatpush1.msra.mxu0 0.0
        %2316 = vmatprep.subr.mxu0 0.0
        %2317 = vmatpush1.msra.mxu0 0.0
        %2318 = vmatprep.subr.mxu0 0.0
        %2319 = vmatpush1.msra.mxu0 0.0
        %2320 = vmatprep.subr.mxu0 0.0
        %2321 = vmatpush1.msra.mxu0 0.0
        %2322 = vmatprep.subr.mxu0 0.0
        %2323 = vmatpush1.msra.mxu0 0.0
        %2324 = vmatprep.subr.mxu0 0.0
        %2325 = vmatpush1.msra.mxu0 0.0
        %2326 = vmatprep.subr.mxu0 0.0
        %2327 = vmatpush1.msra.mxu0 %v2291
        %2328 = vmatprep.subr.mxu0 0.0
        %2329 = vmatpush2.msra.mxu0 0.0
        %2330 = vmatprep.subr.mxu0 0.0
        %2331 = vmatpush2.msra.mxu0 0.0
        %2332 = vmatprep.subr.mxu0 0.0
        %2333 = vmatpush2.msra.mxu0 0.0
        %2334 = vmatprep.subr.mxu0 0.0
        %2335 = vmatpush2.msra.mxu0 0.0
        %2336 = vmatprep.subr.mxu0 0.0
        %2337 = vmatpush2.msra.mxu0 0.0
        %2338 = vmatprep.subr.mxu0 0.0
        %2339 = vmatpush2.msra.mxu0 0.0
        %2340 = vmatprep.subr.mxu0 0.0
        %2341 = vmatpush2.msra.mxu0 0.0
        %2342 = vmatprep.subr.mxu0 0.0
        %2343 = vmatpush2.msra.mxu0 0.0
        %2344 = vmatprep.subr.mxu0 0.0
        %2345 = vmatpush2.msra.mxu0 0.0
        %2346 = vmatprep.subr.mxu0 0.0
        %2347 = vmatpush2.msra.mxu0 0.0
        %2348 = vmatprep.subr.mxu0 0.0
        %2349 = vmatpush2.msra.mxu0 0.0
        %2350 = vmatprep.subr.mxu0 0.0
        %2351 = vmatpush2.msra.mxu0 0.0
        %2352 = vmatprep.subr.mxu0 0.0
        %2353 = vmatpush2.msra.mxu0 0.0
        %2354 = vmatprep.subr.mxu0 0.0
        %2355 = vmatpush2.msra.mxu0 0.0
        %2356 = vmatprep.subr.mxu0 0.0
        %2357 = vmatpush2.msra.mxu0 0.0
        %2358 = vmatprep.subr.mxu0 0.0
        %2359 = vmatpush2.msra.mxu0 0.0
        %2360 = vmatprep.mubr.f32.mxu0 0.0
        %2361 = vmatmul.mubr.f32.gmra.mxu0 %v2294
        %v2362 = vpop.f32.mrf.mxu0
        %v2363 = vadd.f32 0.0, %v2362
        %v2364 = vpop.f32.mrf.mxu0
        %2365 = vdwg.mxu0
        %v2367 = vsel %vm437, %v2363, 0
        %2369 = vmatprep.subr.mxu0 0.0
        %2370 = vmatpush1.msra.mxu0 0.0
        %2371 = vmatprep.subr.mxu0 0.0
        %2372 = vmatpush1.msra.mxu0 0.0
        %2373 = vmatprep.subr.mxu0 0.0
        %2374 = vmatpush1.msra.mxu0 0.0
        %2375 = vmatprep.subr.mxu0 0.0
        %2376 = vmatpush1.msra.mxu0 0.0
        %2377 = vmatprep.subr.mxu0 0.0
        %2378 = vmatpush1.msra.mxu0 0.0
        %2379 = vmatprep.subr.mxu0 0.0
        %2380 = vmatpush1.msra.mxu0 0.0
        %2381 = vmatprep.subr.mxu0 0.0
        %2382 = vmatpush1.msra.mxu0 0.0
        %2383 = vmatprep.subr.mxu0 0.0
        %2384 = vmatpush1.msra.mxu0 0.0
        %2385 = vmatprep.subr.mxu0 0.0
        %2386 = vmatpush1.msra.mxu0 0.0
        %2387 = vmatprep.subr.mxu0 0.0
        %2388 = vmatpush1.msra.mxu0 0.0
        %2389 = vmatprep.subr.mxu0 0.0
        %2390 = vmatpush1.msra.mxu0 0.0
        %2391 = vmatprep.subr.mxu0 0.0
        %2392 = vmatpush1.msra.mxu0 0.0
        %2393 = vmatprep.subr.mxu0 0.0
        %2394 = vmatpush1.msra.mxu0 0.0
        %2395 = vmatprep.subr.mxu0 0.0
        %2396 = vmatpush1.msra.mxu0 0.0
        %2397 = vmatprep.subr.mxu0 0.0
        %2398 = vmatpush1.msra.mxu0 0.0
        %2399 = vmatprep.subr.mxu0 0.0
        %2400 = vmatpush1.msra.mxu0 %v1486
        %2401 = vmatprep.subr.mxu0 0.0
        %2402 = vmatpush2.msra.mxu0 0.0
        %2403 = vmatprep.subr.mxu0 0.0
        %2404 = vmatpush2.msra.mxu0 0.0
        %2405 = vmatprep.subr.mxu0 0.0
        %2406 = vmatpush2.msra.mxu0 0.0
        %2407 = vmatprep.subr.mxu0 0.0
        %2408 = vmatpush2.msra.mxu0 0.0
        %2409 = vmatprep.subr.mxu0 0.0
        %2410 = vmatpush2.msra.mxu0 0.0
        %2411 = vmatprep.subr.mxu0 0.0
        %2412 = vmatpush2.msra.mxu0 0.0
        %2413 = vmatprep.subr.mxu0 0.0
        %2414 = vmatpush2.msra.mxu0 0.0
        %2415 = vmatprep.subr.mxu0 0.0
        %2416 = vmatpush2.msra.mxu0 0.0
        %2417 = vmatprep.subr.mxu0 0.0
        %2418 = vmatpush2.msra.mxu0 0.0
        %2419 = vmatprep.subr.mxu0 0.0
        %2420 = vmatpush2.msra.mxu0 0.0
        %2421 = vmatprep.subr.mxu0 0.0
        %2422 = vmatpush2.msra.mxu0 0.0
        %2423 = vmatprep.subr.mxu0 0.0
        %2424 = vmatpush2.msra.mxu0 0.0
        %2425 = vmatprep.subr.mxu0 0.0
        %2426 = vmatpush2.msra.mxu0 0.0
        %2427 = vmatprep.subr.mxu0 0.0
        %2428 = vmatpush2.msra.mxu0 0.0
        %2429 = vmatprep.subr.mxu0 0.0
        %2430 = vmatpush2.msra.mxu0 0.0
        %2431 = vmatprep.subr.mxu0 0.0
        %2432 = vmatpush2.msra.mxu0 0.0
        %2433 = vmatprep.mubr.f32.mxu0 0.0
        %2434 = vmatmul.mubr.f32.gmra.mxu0 %v2367
        %v2435 = vpop.f32.mrf.mxu0
        %v2436 = vadd.f32 0.0, %v2435
        %v2437 = vpop.f32.mrf.mxu0
        %2438 = vdwg.mxu0
        %v2439 = vadd.f32 %v2200, %v2436
        %s2440 = scalar_lea.vmem %s5, 1
        %v2441 = vld [vmem:[%s2440] sm:$0x1]
        %v2443 = vlaneseq
        %v2444 = vshrl.u32 %v2443, 7
        %v2445 = vsub.s32 0, %v2444
        %v2446 = vrot.slane %v2441, %v2445
        %v2448 = vadd.f32 %v2439, %v2446
        %v2449 = vsel %vm356, %v2448, 0.0
        %2450 = vadd.xlane.f32.xlu0 %v2449
        %v2451 = vpop.xlane.xlu0 %2450
        %v2452 = vrcp.pop 32.0
        %v2453 = vmul.f32 %v2451, %v2452
        %v2454 = vsub.f32 %v2448, %v2453
        %v2455 = vmul.f32 %v2454, %v2454
        %v2456 = vsel %vm356, %v2455, 0.0
        %2457 = vadd.xlane.f32.xlu0 %v2456
        %v2458 = vpop.xlane.xlu0 %2457
        %v2459 = vmul.f32 %v2458, 0.032258064
        %v2460 = vrsqrt.pop %v2459
        %v2461 = vmul.f32 %v2459, %v2460
        %vm2462 = vcmp.eq.f32.partialorder %v2459, inf
        %v2463 = vsel %vm2462, %v2459, %v2461
        %vm2464 = vcmp.eq.f32.partialorder %v2459, 0.0
        %v2465 = vand.u32 %v2459, 2147483648
        %v2466 = vsel %vm2464, %v2465, %v2463
        %v2467 = vld [vmem:[%s6] sm:$0x1]
        %v2468 = vadd.f32 %v2466, 1e-06
        %v2469 = vrcp.pop %v2468
        %v2470 = vmul.f32 %v2454, %v2469
        %v2472 = vlaneseq
        %v2473 = vshrl.u32 %v2472, 7
        %v2474 = vsub.s32 0, %v2473
        %v2475 = vrot.slane %v2467, %v2474
        %v2477 = vmul.f32 %v2475, %v2470
        %v2478 = vld [vmem:[#allocation7] sm:$0x1]
        %v2480 = vlaneseq
        %v2481 = vshrl.u32 %v2480, 7
        %v2482 = vsub.s32 0, %v2481
        %v2483 = vrot.slane %v2478, %v2482
        %v2485 = vadd.f32 %v2477, %v2483
        %2486 = vst.msk [vmem:[%s338] sm:$0xff] %vm356, %v2485
        %s2487 = sand.u32 %s205, 1
        %s2488 = scalar_lea.sflag [#allocation4], %s2487
        %s2489 = sand.u32 %s205, 1
        %s2490 = smul.addr %s2489, 8
        %s2491 = scalar_lea.vmem [#allocation8], %s2490
        // Predicated region
        $region65: #{encoder_forward.1} parent=51 // pred_check
          %p2492 = pneg %p215
        $region66: #{encoder_forward.1} parent=51 // pred_check_branch
          %2494 = sbr.rel (%p2492) target = $region68
        $region67: #{encoder_forward.1} parent=51 // pred_region
          %s2496 = ssub.s32 128, 128
          %2497 = vsyncadd %s2488, %s2496
          %s2498 = smul.addr %s24, 128
          %s2499 = scalar_lea.hbm %s8, %s2498
          %s2501 = sshll.u32 %s2491, 4
          %s2502 = int_to_ptr.vmem [resolvable:$true] %s2501
          %2504 = dma.vmem_to_hbm [thread:$0]  %s2502, 128, %s2499, %s2488
        $region68: #{encoder_forward.1} parent=51 // pred_fallthru
          _
      $region52: #{encoder_forward.1} parent=5 // pred_fallthru
        _
      %p2505 = scmp.le.s32.totalorder 2, %s19
      // Predicated region
      $region69: #{encoder_forward.1} parent=5 // pred_check
        %p2506 = pneg %p2505
      $region70: #{encoder_forward.1} parent=5 // pred_check_branch
        %2508 = sbr.rel (%p2506) target = $region72
      $region71: #{encoder_forward.1} parent=5 // pred_region
        %s2509 = ssub.s32 %s19, 2
        // Predicated region
        $region73: #{encoder_forward.1} parent=71 // pred_check
          %p2510 = pneg %p221
        $region74: #{encoder_forward.1} parent=71 // pred_check_branch
          %2512 = sbr.rel (%p2510) target = $region76
        $region75: #{encoder_forward.1} parent=71 // pred_region
          %s2513 = sand.u32 %s206, 1
          %s2514 = scalar_lea.sflag [#allocation4], %s2513
          %s2515 = sand.u32 %s206, 1
          %s2516 = smul.addr %s2515, 8
          %s2517 = scalar_lea.vmem [#allocation8], %s2516
          %2518 = dma.done %s2514, 128
        $region76: #{encoder_forward.1} parent=71 // pred_fallthru
          _
      $region72: #{encoder_forward.1} parent=5 // pred_fallthru
        _
    $region6: #{encoder_forward.1} parent=1 // loop_footer
      %s23 = sadd.s32 1, %s19
    $region7: #{encoder_forward.1} parent=1 // loop_footer_branch
      %18 = sbr.rel target = $region3
    $region8: #{encoder_forward.1} parent=1 // loop_exit
      _
    %2519 = vsyncpa [#allocation3], 1
    %s2520 = scalar_lea.sflag [#allocation3], 1
    %2521 = vsyncpa %s2520, 1
    %2522 = vsyncpa [#allocation6], 1
    %2523 = vsyncpa [#allocation4], 1
    %s2524 = scalar_lea.sflag [#allocation4], 1
    %2525 = vsyncpa %s2524, 1

</llo_original>
